<compile_context>
chip_gen: v6e
topology: v6e:2x2x1
jax: 0.10.0
libtpu: 0.0.40
codegen_flags: <defaults>
</compile_context>

<pallas_src>
import jax
import jax.numpy as jnp
from jax.experimental import pallas as pl
from jax.experimental.pallas import tpu as pltpu


def _round_up(x, m):
    return (x + m - 1) // m * m


def _vmem_budget_bytes():
    """Per-TensorCore VMEM the fast paths are allowed to plan for."""
    cap = 0
    try:
        cap = int(pltpu.get_tpu_info().vmem_capacity_bytes)
    except Exception:
        cap = 0
    if cap <= 0:
        cap = 64 << 20          # v7x physical per-core VMEM; safe floor for all gens
    return cap * 7 // 8         # leave headroom for Mosaic internal scratch


# --------------------------------------------------------------------------- #
# Kernels
# --------------------------------------------------------------------------- #
def _onehot_gather_kernel(idx_ref, table_ref, out_ref):
    """out[b, :] = table[idx[b], :] via one-hot MXU matmul.

    idx_ref   : (B, 1)  int32   this block's clamped indices (VMEM).
    table_ref : (V, Dp) f32     full table, VMEM-resident across the grid.
    out_ref   : (B, Dp) f32     dense, lane-aligned output slab.
    """
    b = idx_ref.shape[0]
    v = table_ref.shape[0]
    idx = idx_ref[...]                                       # (B, 1)
    iota = jax.lax.broadcasted_iota(jnp.int32, (b, v), 1)    # (B, V)
    one_hot = (idx == iota).astype(table_ref.dtype)          # (B, V), exact 0/1
    out_ref[...] = jnp.dot(
        one_hot, table_ref[...], preferred_element_type=jnp.float32
    ).astype(out_ref.dtype)


def _rowcopy_gather_kernel(idx_smem_ref, table_ref, out_ref):
    """out[j, :] = table[idx[base + j], :] with a VMEM-resident table.

    idx_smem_ref : (Np,)   int32  all clamped indices (SMEM, scalar-prefetched).
    table_ref    : (V, Dp) f32    full table, VMEM-resident across the grid.
    out_ref      : (B, Dp) f32    this step's output slab.
    """
    b = out_ref.shape[0]
    base = pl.program_id(0) * b

    def body(j, carry):
        row = idx_smem_ref[base + j]
        out_ref[pl.ds(j, 1), :] = table_ref[pl.ds(row, 1), :]
        return carry

    jax.lax.fori_loop(0, b, body, 0)


def _dma_gather_kernel(idx_smem_ref, table_hbm_ref, out_ref, buf_ref, sem_ref):
    """Batched manual-DMA row gather for tables that stay in HBM.

    idx_smem_ref  : (Np,)  int32      all clamped indices (SMEM, prefetched).
    table_hbm_ref : (V, Dp)           full table in HBM (memory_space=ANY).
    out_ref       : (R, Dp)           this step's output slab (VMEM block).
    buf_ref       : (2, R, Dp) VMEM   double-buffered row staging.
    sem_ref       : (2, R) DMA sems   one per in-flight row copy.
    """
    i = pl.program_id(0)
    n_steps = pl.num_programs(0)
    rows = buf_ref.shape[1]

    def issue(step):
        slot = step % 2
        base = step * rows
        for r in range(rows):                      # keep `rows` row DMAs in flight
            row = idx_smem_ref[base + r]
            pltpu.make_async_copy(
                table_hbm_ref.at[pl.ds(row, 1), :],
                buf_ref.at[slot, pl.ds(r, 1), :],
                sem_ref.at[slot, r],
            ).start()

    @pl.when(i == 0)
    def _():
        issue(0)                                   # prime the pipeline

    @pl.when(i + 1 < n_steps)
    def _():
        issue(i + 1)                               # prefetch next step's rows

    slot = i % 2
    for r in range(rows):                          # drain this step's rows
        pltpu.make_async_copy(
            table_hbm_ref.at[pl.ds(0, 1), :],      # dummy src (shape only)
            buf_ref.at[slot, pl.ds(r, 1), :],
            sem_ref.at[slot, r],
        ).wait()

    out_ref[...] = buf_ref[slot]                   # dense (R, Dp) writeback


# --------------------------------------------------------------------------- #
# pallas_call wrappers
# --------------------------------------------------------------------------- #
def _blocked_table_spec(num_nodes, dim_p, n_index_args, single):
    """Full-extent table block with a constant index_map (VMEM-resident)."""
    if n_index_args == 1:
        index_map = lambda i: (0, 0)
    else:  # PrefetchScalarGridSpec passes the prefetch ref positionally.
        index_map = lambda i, idx: (0, 0)
    if single:
        return pl.BlockSpec((num_nodes, dim_p), index_map,
                            pipeline_mode=pl.Buffered(1))
    return pl.BlockSpec((num_nodes, dim_p), index_map)


def _run_onehot(flat, table, *, b, dim_p, table_spec, vmem_limit, semantics):
    n = flat.shape[0]
    n_p = _round_up(max(n, 1), b)
    if n_p != n:
        flat = jnp.pad(flat, (0, n_p - n))         # pads with index 0 (valid)
    idx_col = flat.reshape(n_p, 1)
    return pl.pallas_call(
        _onehot_gather_kernel,
        out_shape=jax.ShapeDtypeStruct((n_p, dim_p), table.dtype),
        grid=(n_p // b,),
        in_specs=[
            pl.BlockSpec((b, 1), lambda i: (i, 0)),   # per-step index block
            table_spec,                               # full table, VMEM-resident
        ],
        out_specs=pl.BlockSpec((b, dim_p), lambda i: (i, 0)),
        compiler_params=pltpu.CompilerParams(
            dimension_semantics=semantics,
            vmem_limit_bytes=int(vmem_limit),
        ),
    )(idx_col, table)


def _run_rowcopy(flat, table, *, b, dim_p, table_spec, vmem_limit, semantics):
    n = flat.shape[0]
    n_p = _round_up(max(n, 1), b)
    if n_p != n:
        flat = jnp.pad(flat, (0, n_p - n))
    return pl.pallas_call(
        _rowcopy_gather_kernel,
        out_shape=jax.ShapeDtypeStruct((n_p, dim_p), table.dtype),
        grid_spec=pltpu.PrefetchScalarGridSpec(
            num_scalar_prefetch=1,                    # indices -> SMEM
            grid=(n_p // b,),
            in_specs=[table_spec],
            out_specs=pl.BlockSpec((b, dim_p), lambda i, idx: (i, 0)),
        ),
        compiler_params=pltpu.CompilerParams(
            dimension_semantics=semantics,
            vmem_limit_bytes=int(vmem_limit),
        ),
    )(flat, table)


def _run_dma(flat, table, *, dim_p, rows_per_step=16):
    n = flat.shape[0]
    n_p = _round_up(max(n, 1), rows_per_step)
    if n_p != n:
        flat = jnp.pad(flat, (0, n_p - n))
    return pl.pallas_call(
        _dma_gather_kernel,
        out_shape=jax.ShapeDtypeStruct((n_p, dim_p), table.dtype),
        grid_spec=pltpu.PrefetchScalarGridSpec(
            num_scalar_prefetch=1,                    # indices -> SMEM
            grid=(n_p // rows_per_step,),
            in_specs=[pl.BlockSpec(memory_space=pl.ANY)],   # table stays in HBM
            out_specs=pl.BlockSpec((rows_per_step, dim_p), lambda i, idx: (i, 0)),
            scratch_shapes=[
                pltpu.VMEM((2, rows_per_step, dim_p), table.dtype),
                pltpu.SemaphoreType.DMA((2, rows_per_step)),
            ],
        ),
        compiler_params=pltpu.CompilerParams(
            dimension_semantics=("arbitrary",),       # cross-step DMA hand-off
        ),
    )(flat, table)


# --------------------------------------------------------------------------- #
# Public entry point
# --------------------------------------------------------------------------- #
def embedding_lookup(indices, table, *, block_rows=512, force_path=None):
    """Pallas equivalent of nn.Embedding(num_nodes, dim)(indices)."""
    if force_path not in (None, "onehot", "rowcopy", "dma"):
        raise ValueError(f"unknown force_path: {force_path!r}")

    orig_shape = indices.shape
    num_nodes, dim = table.shape

    flat = indices.reshape(-1).astype(jnp.int32)
    # nn.Embedding raises on out-of-range indices; clamp instead so no OOB
    # load/DMA can ever be generated (documented semantic divergence).
    flat = jnp.clip(flat, 0, num_nodes - 1)
    n = int(flat.shape[0])

    # Lane-dense output: pad embedding dim to a multiple of 128.
    dim_p = _round_up(dim, 128)
    if dim_p != dim:
        table = jnp.pad(table, ((0, 0), (0, dim_p - dim)))

    itemsize = table.dtype.itemsize
    table_bytes = num_nodes * dim_p * itemsize
    budget = _vmem_budget_bytes()

    # Rows per grid step: sublane-dense, big enough to amortize per-step cost.
    b = _round_up(min(block_rows, max(n, 1)), 8)
    out_block_bytes = b * dim_p * itemsize
    use_onehot = num_nodes <= 1024                 # keeps the (B,V) one-hot small
    onehot_scratch = 2 * b * num_nodes * 4 if use_onehot else 0
    working = 2 * out_block_bytes + onehot_scratch + 2 * b * 4 + (4 << 20)

    fits_single = table_bytes + working <= budget
    fits_double = 2 * table_bytes + working <= budget

    if force_path is not None:
        path = force_path
    elif fits_single or fits_double:
        path = "onehot" if use_onehot else "rowcopy"
    else:
        path = "dma"

    out = None
    if path in ("onehot", "rowcopy"):
        n_idx_args = 1 if path == "onehot" else 2
        n_blocks = -(-max(n, 1) // b)
        # On v7x, "parallel" makes each TensorCore hold its own table copy, so
        # only use it when a second copy still fits (neutral on v5e/v6e).
        semantics = ("parallel",) if (n_blocks > 1 and fits_double) else ("arbitrary",)
        runner = _run_onehot if path == "onehot" else _run_rowcopy

        if fits_double:
            table_specs = [_blocked_table_spec(num_nodes, dim_p, n_idx_args, single=False)]
        else:
            # Table fits only once: ask for a single-buffered residency.
            table_specs = [
                pl.BlockSpec(memory_space=pltpu.MemorySpace.VMEM),     # whole array, 1 copy
                _blocked_table_spec(num_nodes, dim_p, n_idx_args, single=True),
            ]

        err = None
        for spec in table_specs:
            try:
                out = runner(flat, table, b=b, dim_p=dim_p, table_spec=spec,
                             vmem_limit=budget, semantics=semantics)
                break
            except Exception as e:     # lowering / VMEM failure -> next strategy
                err = e
        if out is None and force_path is not None:
            raise err

    if out is None:                    # large-table (or forced) HBM DMA gather
        out = _run_dma(flat, table, dim_p=dim_p)

    # Avoid the extra HBM round-trip when no padding was introduced.
    if out.shape[0] != n or out.shape[1] != dim:
        out = out[:n, :dim]
    return out.reshape(*orig_shape, dim)


class EmbeddingLayerPallas:
    """Mirror of the PyTorch EmbeddingLayer: frozen N(0,1) table, forward = lookup."""

    def __init__(self, num_nodes, embedding_dim, seed=0):
        key = jax.random.PRNGKey(seed if seed is not None else 0)
        self.weight = jax.random.normal(
            key, (num_nodes, embedding_dim), dtype=jnp.float32
        )

    def __call__(self, x):
        return embedding_lookup(x, self.weight)


if __name__ == "__main__":
    # Main case (matches the module's intended use): one-hot fast path.
    num_nodes, embedding_dim = 16, 128
    batch, seq = 2, 8
    layer = EmbeddingLayerPallas(num_nodes, embedding_dim, seed=0)

    x = jax.random.randint(jax.random.PRNGKey(0), (batch, seq), 0, num_nodes,
                           dtype=jnp.int32)
    out = jax.block_until_ready(layer(x))
    ref = jnp.take(layer.weight, x, axis=0)
    assert out.shape == (batch, seq, embedding_dim), out.shape
    assert jnp.allclose(out, ref), "mismatch vs reference gather (onehot path)"

    # Padding path: odd lookup count + dim not a multiple of 128.
    layer2 = EmbeddingLayerPallas(12, 72, seed=1)
    x2 = jax.random.randint(jax.random.PRNGKey(1), (3, 5), 0, 12, dtype=jnp.int32)
    out2 = jax.block_until_ready(layer2(x2))
    ref2 = jnp.take(layer2.weight, x2, axis=0)
    assert out2.shape == (3, 5, 72), out2.shape
    assert jnp.allclose(out2, ref2), "mismatch vs reference gather (padded case)"

    # Exercise the larger-vocab VMEM-resident row-copy path explicitly.
    out3 = jax.block_until_ready(
        embedding_lookup(x, layer.weight, force_path="rowcopy"))
    assert jnp.allclose(out3, ref), "mismatch vs reference gather (rowcopy path)"

    # Exercise the HBM manual-DMA gather path explicitly.
    out4 = jax.block_until_ready(
        embedding_lookup(x, layer.weight, force_path="dma"))
    assert jnp.allclose(out4, ref), "mismatch vs reference gather (dma path)"

    print("KERNEL_OK")
</pallas_src>

<mosaic_0001>
module attributes {stable_mosaic.version = 11 : i64} {
  func.func @_onehot_gather_kernel(%arg0: i32, %arg1: memref<16x1xi32, #tpu.memory_space<vmem>>, %arg2: memref<16x128xf32, #tpu.memory_space<vmem>>, %arg3: memref<16x128xf32, #tpu.memory_space<vmem>>) attributes {dimension_semantics = [#tpu.dimension_semantics<arbitrary>], iteration_bounds = array<i64: 1>, scalar_prefetch = 0 : i64, scratch_operands = 0 : i64, tpu.core_type = #tpu.core_type<tc>, window_params = [{transform_indices = @transform_0, window_bounds = array<i64: 16, 1>}, {pipeline_mode = #tpu.pipeline_mode<synchronous>, transform_indices = @transform_1, window_bounds = array<i64: 16, 128>}, {transform_indices = @transform_2, window_bounds = array<i64: 16, 128>}]} {
    %c0 = arith.constant 0 : index
    %c0_0 = arith.constant 0 : index
    %0 = vector.load %arg1[%c0, %c0_0] : memref<16x1xi32, #tpu.memory_space<vmem>>, vector<16x1xi32>
    %1 = tpu.iota {dimensions = array<i32: 1>} : vector<16x16xi32>
    %2 = vector.broadcast %0 : vector<16x1xi32> to vector<16x16xi32>
    %3 = arith.cmpi eq, %2, %1 : vector<16x16xi32>
    %4 = arith.extui %3 : vector<16x16xi1> to vector<16x16xi32>
    %5 = arith.sitofp %4 : vector<16x16xi32> to vector<16x16xf32>
    %c0_1 = arith.constant 0 : index
    %c0_2 = arith.constant 0 : index
    %6 = vector.load %arg2[%c0_1, %c0_2] : memref<16x128xf32, #tpu.memory_space<vmem>>, vector<16x128xf32>
    %cst = arith.constant dense<0.000000e+00> : vector<16x128xf32>
    %7 = tpu.matmul %5, %6, %cst {dimension_numbers = #tpu.dot_dimension_numbers<[1], [0], [0], [1], [0, 0, 1, 1], [], []>} : vector<16x16xf32>, vector<16x128xf32>, vector<16x128xf32> -> vector<16x128xf32>
    %c0_3 = arith.constant 0 : index
    %c0_4 = arith.constant 0 : index
    %8 = vector.load %arg3[%c0_3, %c0_4] : memref<16x128xf32, #tpu.memory_space<vmem>>, vector<16x128xf32>
    tpu.vector_store %arg3[%c0_3, %c0_4], %7 {strides = array<i32>} : memref<16x128xf32, #tpu.memory_space<vmem>>, vector<16x128xf32>,
    return
  }
  func.func @transform_0(%arg0: i32) -> (i32, i32) {
    %c0_i32 = arith.constant 0 : i32
    %c0_i32_0 = arith.constant 0 : i32
    return %arg0, %c0_i32 : i32, i32
  }
  func.func @transform_1(%arg0: i32) -> (i32, i32) {
    %c0_i32 = arith.constant 0 : i32
    %c0_i32_0 = arith.constant 0 : i32
    %c0_i32_1 = arith.constant 0 : i32
    return %c0_i32, %c0_i32_0 : i32, i32
  }
  func.func @transform_2(%arg0: i32) -> (i32, i32) {
    %c0_i32 = arith.constant 0 : i32
    %c0_i32_0 = arith.constant 0 : i32
    return %arg0, %c0_i32 : i32, i32
  }
}

module attributes {stable_mosaic.version = 11 : i64} {
  func.func @_dma_gather_kernel(%arg0: i32, %arg1: memref<16xi32, #tpu.memory_space<smem>>, %arg2: memref<16x128xf32, #tpu.memory_space<any>>, %arg3: memref<16x128xf32, #tpu.memory_space<vmem>>, %arg4: memref<2x16x128xf32, #tpu.memory_space<vmem>>, %arg5: memref<2x16x!tpu.dma_semaphore, #tpu.memory_space<semaphore_mem>>) attributes {dimension_semantics = [#tpu.dimension_semantics<arbitrary>], iteration_bounds = array<i64: 1>, scalar_prefetch = 1 : i64, scratch_operands = 2 : i64, tpu.core_type = #tpu.core_type<tc>, window_params = [{}, {transform_indices = @transform_1, window_bounds = array<i64: 16, 128>}]} {
    %c0_i32 = arith.constant 0 : i32
    %0 = arith.cmpi eq, %arg0, %c0_i32 : i32
    %1 = arith.extui %0 : i1 to i32
    %c0_i32_0 = arith.constant 0 : i32
    %2 = arith.cmpi ne, %1, %c0_i32_0 : i32
    scf.if %2 {
      %c0_78 = arith.constant 0 : index
      %101 = memref.load %arg1[%c0_78] : memref<16xi32, #tpu.memory_space<smem>>
      %c0_i32_79 = arith.constant 0 : i32
      %c0_i32_80 = arith.constant 0 : i32
      %c0_i32_81 = arith.constant 0 : i32
      %c0_i32_82 = arith.constant 0 : i32
      %102 = tpu.memref_slice %arg2[%101, %c0_i32_82] : memref<16x128xf32, #tpu.memory_space<any>> -> memref<1x128xf32, #tpu.memory_space<any>>
      %c0_i32_83 = arith.constant 0 : i32
      %c0_i32_84 = arith.constant 0 : i32
      %103 = tpu.memref_slice %arg4[%c0_i32_79, %c0_i32_83, %c0_i32_84] : memref<2x16x128xf32, #tpu.memory_space<vmem>> -> memref<1x1x128xf32, #tpu.memory_space<vmem>>
      %104 = tpu.memref_squeeze %103 : memref<1x1x128xf32, #tpu.memory_space<vmem>> -> memref<1x128xf32, #tpu.memory_space<vmem>>
      %105 = tpu.memref_slice %arg5[%c0_i32_80, %c0_i32_81] : memref<2x16x!tpu.dma_semaphore, #tpu.memory_space<semaphore_mem>> -> memref<1x1x!tpu.dma_semaphore, #tpu.memory_space<semaphore_mem>>
      %106 = tpu.memref_squeeze %105 : memref<1x1x!tpu.dma_semaphore, #tpu.memory_space<semaphore_mem>> -> memref<!tpu.dma_semaphore, #tpu.memory_space<semaphore_mem>>
      tpu.enqueue_dma source(%102 : memref<1x128xf32, #tpu.memory_space<any>>) target(%104 : memref<1x128xf32, #tpu.memory_space<vmem>>) target_semaphore(%106 : memref<!tpu.dma_semaphore, #tpu.memory_space<semaphore_mem>>)
      %c1 = arith.constant 1 : index
      %107 = memref.load %arg1[%c1] : memref<16xi32, #tpu.memory_space<smem>>
      %c0_i32_85 = arith.constant 0 : i32
      %c0_i32_86 = arith.constant 0 : i32
      %c1_i32_87 = arith.constant 1 : i32
      %c0_i32_88 = arith.constant 0 : i32
      %108 = tpu.memref_slice %arg2[%107, %c0_i32_88] : memref<16x128xf32, #tpu.memory_space<any>> -> memref<1x128xf32, #tpu.memory_space<any>>
      %c1_i32_89 = arith.constant 1 : i32
      %c0_i32_90 = arith.constant 0 : i32
      %109 = tpu.memref_slice %arg4[%c0_i32_85, %c1_i32_89, %c0_i32_90] : memref<2x16x128xf32, #tpu.memory_space<vmem>> -> memref<1x1x128xf32, #tpu.memory_space<vmem>>
      %110 = tpu.memref_squeeze %109 : memref<1x1x128xf32, #tpu.memory_space<vmem>> -> memref<1x128xf32, #tpu.memory_space<vmem>>
      %111 = tpu.memref_slice %arg5[%c0_i32_86, %c1_i32_87] : memref<2x16x!tpu.dma_semaphore, #tpu.memory_space<semaphore_mem>> -> memref<1x1x!tpu.dma_semaphore, #tpu.memory_space<semaphore_mem>>
      %112 = tpu.memref_squeeze %111 : memref<1x1x!tpu.dma_semaphore, #tpu.memory_space<semaphore_mem>> -> memref<!tpu.dma_semaphore, #tpu.memory_space<semaphore_mem>>
      tpu.enqueue_dma source(%108 : memref<1x128xf32, #tpu.memory_space<any>>) target(%110 : memref<1x128xf32, #tpu.memory_space<vmem>>) target_semaphore(%112 : memref<!tpu.dma_semaphore, #tpu.memory_space<semaphore_mem>>)
      %c2 = arith.constant 2 : index
      %113 = memref.load %arg1[%c2] : memref<16xi32, #tpu.memory_space<smem>>
      %c0_i32_91 = arith.constant 0 : i32
      %c0_i32_92 = arith.constant 0 : i32
      %c2_i32_93 = arith.constant 2 : i32
      %c0_i32_94 = arith.constant 0 : i32
      %114 = tpu.memref_slice %arg2[%113, %c0_i32_94] : memref<16x128xf32, #tpu.memory_space<any>> -> memref<1x128xf32, #tpu.memory_space<any>>
      %c2_i32_95 = arith.constant 2 : i32
      %c0_i32_96 = arith.constant 0 : i32
      %115 = tpu.memref_slice %arg4[%c0_i32_91, %c2_i32_95, %c0_i32_96] : memref<2x16x128xf32, #tpu.memory_space<vmem>> -> memref<1x1x128xf32, #tpu.memory_space<vmem>>
      %116 = tpu.memref_squeeze %115 : memref<1x1x128xf32, #tpu.memory_space<vmem>> -> memref<1x128xf32, #tpu.memory_space<vmem>>
      %117 = tpu.memref_slice %arg5[%c0_i32_92, %c2_i32_93] : memref<2x16x!tpu.dma_semaphore, #tpu.memory_space<semaphore_mem>> -> memref<1x1x!tpu.dma_semaphore, #tpu.memory_space<semaphore_mem>>
      %118 = tpu.memref_squeeze %117 : memref<1x1x!tpu.dma_semaphore, #tpu.memory_space<semaphore_mem>> -> memref<!tpu.dma_semaphore, #tpu.memory_space<semaphore_mem>>
      tpu.enqueue_dma source(%114 : memref<1x128xf32, #tpu.memory_space<any>>) target(%116 : memref<1x128xf32, #tpu.memory_space<vmem>>) target_semaphore(%118 : memref<!tpu.dma_semaphore, #tpu.memory_space<semaphore_mem>>)
      %c3 = arith.constant 3 : index
      %119 = memref.load %arg1[%c3] : memref<16xi32, #tpu.memory_space<smem>>
      %c0_i32_97 = arith.constant 0 : i32
      %c0_i32_98 = arith.constant 0 : i32
      %c3_i32_99 = arith.constant 3 : i32
      %c0_i32_100 = arith.constant 0 : i32
      %120 = tpu.memref_slice %arg2[%119, %c0_i32_100] : memref<16x128xf32, #tpu.memory_space<any>> -> memref<1x128xf32, #tpu.memory_space<any>>
      %c3_i32_101 = arith.constant 3 : i32
      %c0_i32_102 = arith.constant 0 : i32
      %121 = tpu.memref_slice %arg4[%c0_i32_97, %c3_i32_101, %c0_i32_102] : memref<2x16x128xf32, #tpu.memory_space<vmem>> -> memref<1x1x128xf32, #tpu.memory_space<vmem>>
      %122 = tpu.memref_squeeze %121 : memref<1x1x128xf32, #tpu.memory_space<vmem>> -> memref<1x128xf32, #tpu.memory_space<vmem>>
      %123 = tpu.memref_slice %arg5[%c0_i32_98, %c3_i32_99] : memref<2x16x!tpu.dma_semaphore, #tpu.memory_space<semaphore_mem>> -> memref<1x1x!tpu.dma_semaphore, #tpu.memory_space<semaphore_mem>>
      %124 = tpu.memref_squeeze %123 : memref<1x1x!tpu.dma_semaphore, #tpu.memory_space<semaphore_mem>> -> memref<!tpu.dma_semaphore, #tpu.memory_space<semaphore_mem>>
      tpu.enqueue_dma source(%120 : memref<1x128xf32, #tpu.memory_space<any>>) target(%122 : memref<1x128xf32, #tpu.memory_space<vmem>>) target_semaphore(%124 : memref<!tpu.dma_semaphore, #tpu.memory_space<semaphore_mem>>)
      %c4 = arith.constant 4 : index
      %125 = memref.load %arg1[%c4] : memref<16xi32, #tpu.memory_space<smem>>
      %c0_i32_103 = arith.constant 0 : i32
      %c0_i32_104 = arith.constant 0 : i32
      %c4_i32_105 = arith.constant 4 : i32
      %c0_i32_106 = arith.constant 0 : i32
      %126 = tpu.memref_slice %arg2[%125, %c0_i32_106] : memref<16x128xf32, #tpu.memory_space<any>> -> memref<1x128xf32, #tpu.memory_space<any>>
      %c4_i32_107 = arith.constant 4 : i32
      %c0_i32_108 = arith.constant 0 : i32
      %127 = tpu.memref_slice %arg4[%c0_i32_103, %c4_i32_107, %c0_i32_108] : memref<2x16x128xf32, #tpu.memory_space<vmem>> -> memref<1x1x128xf32, #tpu.memory_space<vmem>>
      %128 = tpu.memref_squeeze %127 : memref<1x1x128xf32, #tpu.memory_space<vmem>> -> memref<1x128xf32, #tpu.memory_space<vmem>>
      %129 = tpu.memref_slice %arg5[%c0_i32_104, %c4_i32_105] : memref<2x16x!tpu.dma_semaphore, #tpu.memory_space<semaphore_mem>> -> memref<1x1x!tpu.dma_semaphore, #tpu.memory_space<semaphore_mem>>
      %130 = tpu.memref_squeeze %129 : memref<1x1x!tpu.dma_semaphore, #tpu.memory_space<semaphore_mem>> -> memref<!tpu.dma_semaphore, #tpu.memory_space<semaphore_mem>>
      tpu.enqueue_dma source(%126 : memref<1x128xf32, #tpu.memory_space<any>>) target(%128 : memref<1x128xf32, #tpu.memory_space<vmem>>) target_semaphore(%130 : memref<!tpu.dma_semaphore, #tpu.memory_space<semaphore_mem>>)
      %c5 = arith.constant 5 : index
      %131 = memref.load %arg1[%c5] : memref<16xi32, #tpu.memory_space<smem>>
      %c0_i32_109 = arith.constant 0 : i32
      %c0_i32_110 = arith.constant 0 : i32
      %c5_i32_111 = arith.constant 5 : i32
      %c0_i32_112 = arith.constant 0 : i32
      %132 = tpu.memref_slice %arg2[%131, %c0_i32_112] : memref<16x128xf32, #tpu.memory_space<any>> -> memref<1x128xf32, #tpu.memory_space<any>>
      %c5_i32_113 = arith.constant 5 : i32
      %c0_i32_114 = arith.constant 0 : i32
      %133 = tpu.memref_slice %arg4[%c0_i32_109, %c5_i32_113, %c0_i32_114] : memref<2x16x128xf32, #tpu.memory_space<vmem>> -> memref<1x1x128xf32, #tpu.memory_space<vmem>>
      %134 = tpu.memref_squeeze %133 : memref<1x1x128xf32, #tpu.memory_space<vmem>> -> memref<1x128xf32, #tpu.memory_space<vmem>>
      %135 = tpu.memref_slice %arg5[%c0_i32_110, %c5_i32_111] : memref<2x16x!tpu.dma_semaphore, #tpu.memory_space<semaphore_mem>> -> memref<1x1x!tpu.dma_semaphore, #tpu.memory_space<semaphore_mem>>
      %136 = tpu.memref_squeeze %135 : memref<1x1x!tpu.dma_semaphore, #tpu.memory_space<semaphore_mem>> -> memref<!tpu.dma_semaphore, #tpu.memory_space<semaphore_mem>>
      tpu.enqueue_dma source(%132 : memref<1x128xf32, #tpu.memory_space<any>>) target(%134 : memref<1x128xf32, #tpu.memory_space<vmem>>) target_semaphore(%136 : memref<!tpu.dma_semaphore, #tpu.memory_space<semaphore_mem>>)
      %c6 = arith.constant 6 : index
      %137 = memref.load %arg1[%c6] : memref<16xi32, #tpu.memory_space<smem>>
      %c0_i32_115 = arith.constant 0 : i32
      %c0_i32_116 = arith.constant 0 : i32
      %c6_i32_117 = arith.constant 6 : i32
      %c0_i32_118 = arith.constant 0 : i32
      %138 = tpu.memref_slice %arg2[%137, %c0_i32_118] : memref<16x128xf32, #tpu.memory_space<any>> -> memref<1x128xf32, #tpu.memory_space<any>>
      %c6_i32_119 = arith.constant 6 : i32
      %c0_i32_120 = arith.constant 0 : i32
      %139 = tpu.memref_slice %arg4[%c0_i32_115, %c6_i32_119, %c0_i32_120] : memref<2x16x128xf32, #tpu.memory_space<vmem>> -> memref<1x1x128xf32, #tpu.memory_space<vmem>>
      %140 = tpu.memref_squeeze %139 : memref<1x1x128xf32, #tpu.memory_space<vmem>> -> memref<1x128xf32, #tpu.memory_space<vmem>>
      %141 = tpu.memref_slice %arg5[%c0_i32_116, %c6_i32_117] : memref<2x16x!tpu.dma_semaphore, #tpu.memory_space<semaphore_mem>> -> memref<1x1x!tpu.dma_semaphore, #tpu.memory_space<semaphore_mem>>
      %142 = tpu.memref_squeeze %141 : memref<1x1x!tpu.dma_semaphore, #tpu.memory_space<semaphore_mem>> -> memref<!tpu.dma_semaphore, #tpu.memory_space<semaphore_mem>>
      tpu.enqueue_dma source(%138 : memref<1x128xf32, #tpu.memory_space<any>>) target(%140 : memref<1x128xf32, #tpu.memory_space<vmem>>) target_semaphore(%142 : memref<!tpu.dma_semaphore, #tpu.memory_space<semaphore_mem>>)
      %c7 = arith.constant 7 : index
      %143 = memref.load %arg1[%c7] : memref<16xi32, #tpu.memory_space<smem>>
      %c0_i32_121 = arith.constant 0 : i32
      %c0_i32_122 = arith.constant 0 : i32
      %c7_i32_123 = arith.constant 7 : i32
      %c0_i32_124 = arith.constant 0 : i32
      %144 = tpu.memref_slice %arg2[%143, %c0_i32_124] : memref<16x128xf32, #tpu.memory_space<any>> -> memref<1x128xf32, #tpu.memory_space<any>>
      %c7_i32_125 = arith.constant 7 : i32
      %c0_i32_126 = arith.constant 0 : i32
      %145 = tpu.memref_slice %arg4[%c0_i32_121, %c7_i32_125, %c0_i32_126] : memref<2x16x128xf32, #tpu.memory_space<vmem>> -> memref<1x1x128xf32, #tpu.memory_space<vmem>>
      %146 = tpu.memref_squeeze %145 : memref<1x1x128xf32, #tpu.memory_space<vmem>> -> memref<1x128xf32, #tpu.memory_space<vmem>>
      %147 = tpu.memref_slice %arg5[%c0_i32_122, %c7_i32_123] : memref<2x16x!tpu.dma_semaphore, #tpu.memory_space<semaphore_mem>> -> memref<1x1x!tpu.dma_semaphore, #tpu.memory_space<semaphore_mem>>
      %148 = tpu.memref_squeeze %147 : memref<1x1x!tpu.dma_semaphore, #tpu.memory_space<semaphore_mem>> -> memref<!tpu.dma_semaphore, #tpu.memory_space<semaphore_mem>>
      tpu.enqueue_dma source(%144 : memref<1x128xf32, #tpu.memory_space<any>>) target(%146 : memref<1x128xf32, #tpu.memory_space<vmem>>) target_semaphore(%148 : memref<!tpu.dma_semaphore, #tpu.memory_space<semaphore_mem>>)
      %c8 = arith.constant 8 : index
      %149 = memref.load %arg1[%c8] : memref<16xi32, #tpu.memory_space<smem>>
      %c0_i32_127 = arith.constant 0 : i32
      %c0_i32_128 = arith.constant 0 : i32
      %c8_i32_129 = arith.constant 8 : i32
      %c0_i32_130 = arith.constant 0 : i32
      %150 = tpu.memref_slice %arg2[%149, %c0_i32_130] : memref<16x128xf32, #tpu.memory_space<any>> -> memref<1x128xf32, #tpu.memory_space<any>>
      %c8_i32_131 = arith.constant 8 : i32
      %c0_i32_132 = arith.constant 0 : i32
      %151 = tpu.memref_slice %arg4[%c0_i32_127, %c8_i32_131, %c0_i32_132] : memref<2x16x128xf32, #tpu.memory_space<vmem>> -> memref<1x1x128xf32, #tpu.memory_space<vmem>>
      %152 = tpu.memref_squeeze %151 : memref<1x1x128xf32, #tpu.memory_space<vmem>> -> memref<1x128xf32, #tpu.memory_space<vmem>>
      %153 = tpu.memref_slice %arg5[%c0_i32_128, %c8_i32_129] : memref<2x16x!tpu.dma_semaphore, #tpu.memory_space<semaphore_mem>> -> memref<1x1x!tpu.dma_semaphore, #tpu.memory_space<semaphore_mem>>
      %154 = tpu.memref_squeeze %153 : memref<1x1x!tpu.dma_semaphore, #tpu.memory_space<semaphore_mem>> -> memref<!tpu.dma_semaphore, #tpu.memory_space<semaphore_mem>>
      tpu.enqueue_dma source(%150 : memref<1x128xf32, #tpu.memory_space<any>>) target(%152 : memref<1x128xf32, #tpu.memory_space<vmem>>) target_semaphore(%154 : memref<!tpu.dma_semaphore, #tpu.memory_space<semaphore_mem>>)
      %c9 = arith.constant 9 : index
      %155 = memref.load %arg1[%c9] : memref<16xi32, #tpu.memory_space<smem>>
      %c0_i32_133 = arith.constant 0 : i32
      %c0_i32_134 = arith.constant 0 : i32
      %c9_i32_135 = arith.constant 9 : i32
      %c0_i32_136 = arith.constant 0 : i32
      %156 = tpu.memref_slice %arg2[%155, %c0_i32_136] : memref<16x128xf32, #tpu.memory_space<any>> -> memref<1x128xf32, #tpu.memory_space<any>>
      %c9_i32_137 = arith.constant 9 : i32
      %c0_i32_138 = arith.constant 0 : i32
      %157 = tpu.memref_slice %arg4[%c0_i32_133, %c9_i32_137, %c0_i32_138] : memref<2x16x128xf32, #tpu.memory_space<vmem>> -> memref<1x1x128xf32, #tpu.memory_space<vmem>>
      %158 = tpu.memref_squeeze %157 : memref<1x1x128xf32, #tpu.memory_space<vmem>> -> memref<1x128xf32, #tpu.memory_space<vmem>>
      %159 = tpu.memref_slice %arg5[%c0_i32_134, %c9_i32_135] : memref<2x16x!tpu.dma_semaphore, #tpu.memory_space<semaphore_mem>> -> memref<1x1x!tpu.dma_semaphore, #tpu.memory_space<semaphore_mem>>
      %160 = tpu.memref_squeeze %159 : memref<1x1x!tpu.dma_semaphore, #tpu.memory_space<semaphore_mem>> -> memref<!tpu.dma_semaphore, #tpu.memory_space<semaphore_mem>>
      tpu.enqueue_dma source(%156 : memref<1x128xf32, #tpu.memory_space<any>>) target(%158 : memref<1x128xf32, #tpu.memory_space<vmem>>) target_semaphore(%160 : memref<!tpu.dma_semaphore, #tpu.memory_space<semaphore_mem>>)
      %c10 = arith.constant 10 : index
      %161 = memref.load %arg1[%c10] : memref<16xi32, #tpu.memory_space<smem>>
      %c0_i32_139 = arith.constant 0 : i32
      %c0_i32_140 = arith.constant 0 : i32
      %c10_i32_141 = arith.constant 10 : i32
      %c0_i32_142 = arith.constant 0 : i32
      %162 = tpu.memref_slice %arg2[%161, %c0_i32_142] : memref<16x128xf32, #tpu.memory_space<any>> -> memref<1x128xf32, #tpu.memory_space<any>>
      %c10_i32_143 = arith.constant 10 : i32
      %c0_i32_144 = arith.constant 0 : i32
      %163 = tpu.memref_slice %arg4[%c0_i32_139, %c10_i32_143, %c0_i32_144] : memref<2x16x128xf32, #tpu.memory_space<vmem>> -> memref<1x1x128xf32, #tpu.memory_space<vmem>>
      %164 = tpu.memref_squeeze %163 : memref<1x1x128xf32, #tpu.memory_space<vmem>> -> memref<1x128xf32, #tpu.memory_space<vmem>>
      %165 = tpu.memref_slice %arg5[%c0_i32_140, %c10_i32_141] : memref<2x16x!tpu.dma_semaphore, #tpu.memory_space<semaphore_mem>> -> memref<1x1x!tpu.dma_semaphore, #tpu.memory_space<semaphore_mem>>
      %166 = tpu.memref_squeeze %165 : memref<1x1x!tpu.dma_semaphore, #tpu.memory_space<semaphore_mem>> -> memref<!tpu.dma_semaphore, #tpu.memory_space<semaphore_mem>>
      tpu.enqueue_dma source(%162 : memref<1x128xf32, #tpu.memory_space<any>>) target(%164 : memref<1x128xf32, #tpu.memory_space<vmem>>) target_semaphore(%166 : memref<!tpu.dma_semaphore, #tpu.memory_space<semaphore_mem>>)
      %c11 = arith.constant 11 : index
      %167 = memref.load %arg1[%c11] : memref<16xi32, #tpu.memory_space<smem>>
      %c0_i32_145 = arith.constant 0 : i32
      %c0_i32_146 = arith.constant 0 : i32
      %c11_i32_147 = arith.constant 11 : i32
      %c0_i32_148 = arith.constant 0 : i32
      %168 = tpu.memref_slice %arg2[%167, %c0_i32_148] : memref<16x128xf32, #tpu.memory_space<any>> -> memref<1x128xf32, #tpu.memory_space<any>>
      %c11_i32_149 = arith.constant 11 : i32
      %c0_i32_150 = arith.constant 0 : i32
      %169 = tpu.memref_slice %arg4[%c0_i32_145, %c11_i32_149, %c0_i32_150] : memref<2x16x128xf32, #tpu.memory_space<vmem>> -> memref<1x1x128xf32, #tpu.memory_space<vmem>>
      %170 = tpu.memref_squeeze %169 : memref<1x1x128xf32, #tpu.memory_space<vmem>> -> memref<1x128xf32, #tpu.memory_space<vmem>>
      %171 = tpu.memref_slice %arg5[%c0_i32_146, %c11_i32_147] : memref<2x16x!tpu.dma_semaphore, #tpu.memory_space<semaphore_mem>> -> memref<1x1x!tpu.dma_semaphore, #tpu.memory_space<semaphore_mem>>
      %172 = tpu.memref_squeeze %171 : memref<1x1x!tpu.dma_semaphore, #tpu.memory_space<semaphore_mem>> -> memref<!tpu.dma_semaphore, #tpu.memory_space<semaphore_mem>>
      tpu.enqueue_dma source(%168 : memref<1x128xf32, #tpu.memory_space<any>>) target(%170 : memref<1x128xf32, #tpu.memory_space<vmem>>) target_semaphore(%172 : memref<!tpu.dma_semaphore, #tpu.memory_space<semaphore_mem>>)
      %c12 = arith.constant 12 : index
      %173 = memref.load %arg1[%c12] : memref<16xi32, #tpu.memory_space<smem>>
      %c0_i32_151 = arith.constant 0 : i32
      %c0_i32_152 = arith.constant 0 : i32
      %c12_i32_153 = arith.constant 12 : i32
      %c0_i32_154 = arith.constant 0 : i32
      %174 = tpu.memref_slice %arg2[%173, %c0_i32_154] : memref<16x128xf32, #tpu.memory_space<any>> -> memref<1x128xf32, #tpu.memory_space<any>>
      %c12_i32_155 = arith.constant 12 : i32
      %c0_i32_156 = arith.constant 0 : i32
      %175 = tpu.memref_slice %arg4[%c0_i32_151, %c12_i32_155, %c0_i32_156] : memref<2x16x128xf32, #tpu.memory_space<vmem>> -> memref<1x1x128xf32, #tpu.memory_space<vmem>>
      %176 = tpu.memref_squeeze %175 : memref<1x1x128xf32, #tpu.memory_space<vmem>> -> memref<1x128xf32, #tpu.memory_space<vmem>>
      %177 = tpu.memref_slice %arg5[%c0_i32_152, %c12_i32_153] : memref<2x16x!tpu.dma_semaphore, #tpu.memory_space<semaphore_mem>> -> memref<1x1x!tpu.dma_semaphore, #tpu.memory_space<semaphore_mem>>
      %178 = tpu.memref_squeeze %177 : memref<1x1x!tpu.dma_semaphore, #tpu.memory_space<semaphore_mem>> -> memref<!tpu.dma_semaphore, #tpu.memory_space<semaphore_mem>>
      tpu.enqueue_dma source(%174 : memref<1x128xf32, #tpu.memory_space<any>>) target(%176 : memref<1x128xf32, #tpu.memory_space<vmem>>) target_semaphore(%178 : memref<!tpu.dma_semaphore, #tpu.memory_space<semaphore_mem>>)
      %c13 = arith.constant 13 : index
      %179 = memref.load %arg1[%c13] : memref<16xi32, #tpu.memory_space<smem>>
      %c0_i32_157 = arith.constant 0 : i32
      %c0_i32_158 = arith.constant 0 : i32
      %c13_i32_159 = arith.constant 13 : i32
      %c0_i32_160 = arith.constant 0 : i32
      %180 = tpu.memref_slice %arg2[%179, %c0_i32_160] : memref<16x128xf32, #tpu.memory_space<any>> -> memref<1x128xf32, #tpu.memory_space<any>>
      %c13_i32_161 = arith.constant 13 : i32
      %c0_i32_162 = arith.constant 0 : i32
      %181 = tpu.memref_slice %arg4[%c0_i32_157, %c13_i32_161, %c0_i32_162] : memref<2x16x128xf32, #tpu.memory_space<vmem>> -> memref<1x1x128xf32, #tpu.memory_space<vmem>>
      %182 = tpu.memref_squeeze %181 : memref<1x1x128xf32, #tpu.memory_space<vmem>> -> memref<1x128xf32, #tpu.memory_space<vmem>>
      %183 = tpu.memref_slice %arg5[%c0_i32_158, %c13_i32_159] : memref<2x16x!tpu.dma_semaphore, #tpu.memory_space<semaphore_mem>> -> memref<1x1x!tpu.dma_semaphore, #tpu.memory_space<semaphore_mem>>
      %184 = tpu.memref_squeeze %183 : memref<1x1x!tpu.dma_semaphore, #tpu.memory_space<semaphore_mem>> -> memref<!tpu.dma_semaphore, #tpu.memory_space<semaphore_mem>>
      tpu.enqueue_dma source(%180 : memref<1x128xf32, #tpu.memory_space<any>>) target(%182 : memref<1x128xf32, #tpu.memory_space<vmem>>) target_semaphore(%184 : memref<!tpu.dma_semaphore, #tpu.memory_space<semaphore_mem>>)
      %c14 = arith.constant 14 : index
      %185 = memref.load %arg1[%c14] : memref<16xi32, #tpu.memory_space<smem>>
      %c0_i32_163 = arith.constant 0 : i32
      %c0_i32_164 = arith.constant 0 : i32
      %c14_i32_165 = arith.constant 14 : i32
      %c0_i32_166 = arith.constant 0 : i32
      %186 = tpu.memref_slice %arg2[%185, %c0_i32_166] : memref<16x128xf32, #tpu.memory_space<any>> -> memref<1x128xf32, #tpu.memory_space<any>>
      %c14_i32_167 = arith.constant 14 : i32
      %c0_i32_168 = arith.constant 0 : i32
      %187 = tpu.memref_slice %arg4[%c0_i32_163, %c14_i32_167, %c0_i32_168] : memref<2x16x128xf32, #tpu.memory_space<vmem>> -> memref<1x1x128xf32, #tpu.memory_space<vmem>>
      %188 = tpu.memref_squeeze %187 : memref<1x1x128xf32, #tpu.memory_space<vmem>> -> memref<1x128xf32, #tpu.memory_space<vmem>>
      %189 = tpu.memref_slice %arg5[%c0_i32_164, %c14_i32_165] : memref<2x16x!tpu.dma_semaphore, #tpu.memory_space<semaphore_mem>> -> memref<1x1x!tpu.dma_semaphore, #tpu.memory_space<semaphore_mem>>
      %190 = tpu.memref_squeeze %189 : memref<1x1x!tpu.dma_semaphore, #tpu.memory_space<semaphore_mem>> -> memref<!tpu.dma_semaphore, #tpu.memory_space<semaphore_mem>>
      tpu.enqueue_dma source(%186 : memref<1x128xf32, #tpu.memory_space<any>>) target(%188 : memref<1x128xf32, #tpu.memory_space<vmem>>) target_semaphore(%190 : memref<!tpu.dma_semaphore, #tpu.memory_space<semaphore_mem>>)
      %c15 = arith.constant 15 : index
      %191 = memref.load %arg1[%c15] : memref<16xi32, #tpu.memory_space<smem>>
      %c0_i32_169 = arith.constant 0 : i32
      %c0_i32_170 = arith.constant 0 : i32
      %c15_i32_171 = arith.constant 15 : i32
      %c0_i32_172 = arith.constant 0 : i32
      %192 = tpu.memref_slice %arg2[%191, %c0_i32_172] : memref<16x128xf32, #tpu.memory_space<any>> -> memref<1x128xf32, #tpu.memory_space<any>>
      %c15_i32_173 = arith.constant 15 : i32
      %c0_i32_174 = arith.constant 0 : i32
      %193 = tpu.memref_slice %arg4[%c0_i32_169, %c15_i32_173, %c0_i32_174] : memref<2x16x128xf32, #tpu.memory_space<vmem>> -> memref<1x1x128xf32, #tpu.memory_space<vmem>>
      %194 = tpu.memref_squeeze %193 : memref<1x1x128xf32, #tpu.memory_space<vmem>> -> memref<1x128xf32, #tpu.memory_space<vmem>>
      %195 = tpu.memref_slice %arg5[%c0_i32_170, %c15_i32_171] : memref<2x16x!tpu.dma_semaphore, #tpu.memory_space<semaphore_mem>> -> memref<1x1x!tpu.dma_semaphore, #tpu.memory_space<semaphore_mem>>
      %196 = tpu.memref_squeeze %195 : memref<1x1x!tpu.dma_semaphore, #tpu.memory_space<semaphore_mem>> -> memref<!tpu.dma_semaphore, #tpu.memory_space<semaphore_mem>>
      tpu.enqueue_dma source(%192 : memref<1x128xf32, #tpu.memory_space<any>>) target(%194 : memref<1x128xf32, #tpu.memory_space<vmem>>) target_semaphore(%196 : memref<!tpu.dma_semaphore, #tpu.memory_space<semaphore_mem>>)
    } else {
    }
    %c1_i32 = arith.constant 1 : i32
    %3 = arith.addi %arg0, %c1_i32 : i32
    %c1_i32_1 = arith.constant 1 : i32
    %4 = arith.cmpi slt, %3, %c1_i32_1 : i32
    %5 = arith.extui %4 : i1 to i32
    %c0_i32_2 = arith.constant 0 : i32
    %6 = arith.cmpi ne, %5, %c0_i32_2 : i32
    scf.if %6 {
      %c1_i32_78 = arith.constant 1 : i32
      %101 = arith.addi %arg0, %c1_i32_78 : i32
      %c2_i32_79 = arith.constant 2 : i32
      %c0_i32_80 = arith.constant 0 : i32
      %102 = arith.cmpi eq, %c2_i32_79, %c0_i32_80 : i32
      %c1_i32_81 = arith.constant 1 : i32
      %103 = arith.select %102, %c1_i32_81, %c2_i32_79 : i32
      %104 = arith.remsi %101, %103 : i32
      %c0_i32_82 = arith.constant 0 : i32
      %105 = arith.cmpi ne, %104, %c0_i32_82 : i32
      %c0_i32_83 = arith.constant 0 : i32
      %106 = arith.cmpi slt, %104, %c0_i32_83 : i32
      %c0_i32_84 = arith.constant 0 : i32
      %107 = arith.cmpi slt, %103, %c0_i32_84 : i32
      %108 = arith.xori %106, %107 : i1
      %109 = arith.andi %108, %105 : i1
      %110 = arith.addi %104, %103 : i32
      %111 = arith.select %109, %110, %104 : i32
      %c16_i32 = arith.constant 16 : i32
      %112 = arith.muli %101, %c16_i32 : i32
      %c0_i32_85 = arith.constant 0 : i32
      %113 = arith.addi %112, %c0_i32_85 : i32
      %114 = arith.index_cast %113 : i32 to index
      %115 = memref.load %arg1[%114] : memref<16xi32, #tpu.memory_space<smem>>
      %c0_i32_86 = arith.constant 0 : i32
      %c0_i32_87 = arith.constant 0 : i32
      %116 = tpu.memref_slice %arg2[%115, %c0_i32_87] : memref<16x128xf32, #tpu.memory_space<any>> -> memref<1x128xf32, #tpu.memory_space<any>>
      %c0_i32_88 = arith.constant 0 : i32
      %c0_i32_89 = arith.constant 0 : i32
      %117 = tpu.memref_slice %arg4[%111, %c0_i32_88, %c0_i32_89] : memref<2x16x128xf32, #tpu.memory_space<vmem>> -> memref<1x1x128xf32, #tpu.memory_space<vmem>>
      %118 = tpu.memref_squeeze %117 : memref<1x1x128xf32, #tpu.memory_space<vmem>> -> memref<1x128xf32, #tpu.memory_space<vmem>>
      %119 = tpu.memref_slice %arg5[%111, %c0_i32_86] : memref<2x16x!tpu.dma_semaphore, #tpu.memory_space<semaphore_mem>> -> memref<1x1x!tpu.dma_semaphore, #tpu.memory_space<semaphore_mem>>
      %120 = tpu.memref_squeeze %119 : memref<1x1x!tpu.dma_semaphore, #tpu.memory_space<semaphore_mem>> -> memref<!tpu.dma_semaphore, #tpu.memory_space<semaphore_mem>>
      tpu.enqueue_dma source(%116 : memref<1x128xf32, #tpu.memory_space<any>>) target(%118 : memref<1x128xf32, #tpu.memory_space<vmem>>) target_semaphore(%120 : memref<!tpu.dma_semaphore, #tpu.memory_space<semaphore_mem>>)
      %c1_i32_90 = arith.constant 1 : i32
      %121 = arith.addi %112, %c1_i32_90 : i32
      %122 = arith.index_cast %121 : i32 to index
      %123 = memref.load %arg1[%122] : memref<16xi32, #tpu.memory_space<smem>>
      %c1_i32_91 = arith.constant 1 : i32
      %c0_i32_92 = arith.constant 0 : i32
      %124 = tpu.memref_slice %arg2[%123, %c0_i32_92] : memref<16x128xf32, #tpu.memory_space<any>> -> memref<1x128xf32, #tpu.memory_space<any>>
      %c1_i32_93 = arith.constant 1 : i32
      %c0_i32_94 = arith.constant 0 : i32
      %125 = tpu.memref_slice %arg4[%111, %c1_i32_93, %c0_i32_94] : memref<2x16x128xf32, #tpu.memory_space<vmem>> -> memref<1x1x128xf32, #tpu.memory_space<vmem>>
      %126 = tpu.memref_squeeze %125 : memref<1x1x128xf32, #tpu.memory_space<vmem>> -> memref<1x128xf32, #tpu.memory_space<vmem>>
      %127 = tpu.memref_slice %arg5[%111, %c1_i32_91] : memref<2x16x!tpu.dma_semaphore, #tpu.memory_space<semaphore_mem>> -> memref<1x1x!tpu.dma_semaphore, #tpu.memory_space<semaphore_mem>>
      %128 = tpu.memref_squeeze %127 : memref<1x1x!tpu.dma_semaphore, #tpu.memory_space<semaphore_mem>> -> memref<!tpu.dma_semaphore, #tpu.memory_space<semaphore_mem>>
      tpu.enqueue_dma source(%124 : memref<1x128xf32, #tpu.memory_space<any>>) target(%126 : memref<1x128xf32, #tpu.memory_space<vmem>>) target_semaphore(%128 : memref<!tpu.dma_semaphore, #tpu.memory_space<semaphore_mem>>)
      %c2_i32_95 = arith.constant 2 : i32
      %129 = arith.addi %112, %c2_i32_95 : i32
      %130 = arith.index_cast %129 : i32 to index
      %131 = memref.load %arg1[%130] : memref<16xi32, #tpu.memory_space<smem>>
      %c2_i32_96 = arith.constant 2 : i32
      %c0_i32_97 = arith.constant 0 : i32
      %132 = tpu.memref_slice %arg2[%131, %c0_i32_97] : memref<16x128xf32, #tpu.memory_space<any>> -> memref<1x128xf32, #tpu.memory_space<any>>
      %c2_i32_98 = arith.constant 2 : i32
      %c0_i32_99 = arith.constant 0 : i32
      %133 = tpu.memref_slice %arg4[%111, %c2_i32_98, %c0_i32_99] : memref<2x16x128xf32, #tpu.memory_space<vmem>> -> memref<1x1x128xf32, #tpu.memory_space<vmem>>
      %134 = tpu.memref_squeeze %133 : memref<1x1x128xf32, #tpu.memory_space<vmem>> -> memref<1x128xf32, #tpu.memory_space<vmem>>
      %135 = tpu.memref_slice %arg5[%111, %c2_i32_96] : memref<2x16x!tpu.dma_semaphore, #tpu.memory_space<semaphore_mem>> -> memref<1x1x!tpu.dma_semaphore, #tpu.memory_space<semaphore_mem>>
      %136 = tpu.memref_squeeze %135 : memref<1x1x!tpu.dma_semaphore, #tpu.memory_space<semaphore_mem>> -> memref<!tpu.dma_semaphore, #tpu.memory_space<semaphore_mem>>
      tpu.enqueue_dma source(%132 : memref<1x128xf32, #tpu.memory_space<any>>) target(%134 : memref<1x128xf32, #tpu.memory_space<vmem>>) target_semaphore(%136 : memref<!tpu.dma_semaphore, #tpu.memory_space<semaphore_mem>>)
      %c3_i32_100 = arith.constant 3 : i32
      %137 = arith.addi %112, %c3_i32_100 : i32
      %138 = arith.index_cast %137 : i32 to index
      %139 = memref.load %arg1[%138] : memref<16xi32, #tpu.memory_space<smem>>
      %c3_i32_101 = arith.constant 3 : i32
      %c0_i32_102 = arith.constant 0 : i32
      %140 = tpu.memref_slice %arg2[%139, %c0_i32_102] : memref<16x128xf32, #tpu.memory_space<any>> -> memref<1x128xf32, #tpu.memory_space<any>>
      %c3_i32_103 = arith.constant 3 : i32
      %c0_i32_104 = arith.constant 0 : i32
      %141 = tpu.memref_slice %arg4[%111, %c3_i32_103, %c0_i32_104] : memref<2x16x128xf32, #tpu.memory_space<vmem>> -> memref<1x1x128xf32, #tpu.memory_space<vmem>>
      %142 = tpu.memref_squeeze %141 : memref<1x1x128xf32, #tpu.memory_space<vmem>> -> memref<1x128xf32, #tpu.memory_space<vmem>>
      %143 = tpu.memref_slice %arg5[%111, %c3_i32_101] : memref<2x16x!tpu.dma_semaphore, #tpu.memory_space<semaphore_mem>> -> memref<1x1x!tpu.dma_semaphore, #tpu.memory_space<semaphore_mem>>
      %144 = tpu.memref_squeeze %143 : memref<1x1x!tpu.dma_semaphore, #tpu.memory_space<semaphore_mem>> -> memref<!tpu.dma_semaphore, #tpu.memory_space<semaphore_mem>>
      tpu.enqueue_dma source(%140 : memref<1x128xf32, #tpu.memory_space<any>>) target(%142 : memref<1x128xf32, #tpu.memory_space<vmem>>) target_semaphore(%144 : memref<!tpu.dma_semaphore, #tpu.memory_space<semaphore_mem>>)
      %c4_i32_105 = arith.constant 4 : i32
      %145 = arith.addi %112, %c4_i32_105 : i32
      %146 = arith.index_cast %145 : i32 to index
      %147 = memref.load %arg1[%146] : memref<16xi32, #tpu.memory_space<smem>>
      %c4_i32_106 = arith.constant 4 : i32
      %c0_i32_107 = arith.constant 0 : i32
      %148 = tpu.memref_slice %arg2[%147, %c0_i32_107] : memref<16x128xf32, #tpu.memory_space<any>> -> memref<1x128xf32, #tpu.memory_space<any>>
      %c4_i32_108 = arith.constant 4 : i32
      %c0_i32_109 = arith.constant 0 : i32
      %149 = tpu.memref_slice %arg4[%111, %c4_i32_108, %c0_i32_109] : memref<2x16x128xf32, #tpu.memory_space<vmem>> -> memref<1x1x128xf32, #tpu.memory_space<vmem>>
      %150 = tpu.memref_squeeze %149 : memref<1x1x128xf32, #tpu.memory_space<vmem>> -> memref<1x128xf32, #tpu.memory_space<vmem>>
      %151 = tpu.memref_slice %arg5[%111, %c4_i32_106] : memref<2x16x!tpu.dma_semaphore, #tpu.memory_space<semaphore_mem>> -> memref<1x1x!tpu.dma_semaphore, #tpu.memory_space<semaphore_mem>>
      %152 = tpu.memref_squeeze %151 : memref<1x1x!tpu.dma_semaphore, #tpu.memory_space<semaphore_mem>> -> memref<!tpu.dma_semaphore, #tpu.memory_space<semaphore_mem>>
      tpu.enqueue_dma source(%148 : memref<1x128xf32, #tpu.memory_space<any>>) target(%150 : memref<1x128xf32, #tpu.memory_space<vmem>>) target_semaphore(%152 : memref<!tpu.dma_semaphore, #tpu.memory_space<semaphore_mem>>)
      %c5_i32_110 = arith.constant 5 : i32
      %153 = arith.addi %112, %c5_i32_110 : i32
      %154 = arith.index_cast %153 : i32 to index
      %155 = memref.load %arg1[%154] : memref<16xi32, #tpu.memory_space<smem>>
      %c5_i32_111 = arith.constant 5 : i32
      %c0_i32_112 = arith.constant 0 : i32
      %156 = tpu.memref_slice %arg2[%155, %c0_i32_112] : memref<16x128xf32, #tpu.memory_space<any>> -> memref<1x128xf32, #tpu.memory_space<any>>
      %c5_i32_113 = arith.constant 5 : i32
      %c0_i32_114 = arith.constant 0 : i32
      %157 = tpu.memref_slice %arg4[%111, %c5_i32_113, %c0_i32_114] : memref<2x16x128xf32, #tpu.memory_space<vmem>> -> memref<1x1x128xf32, #tpu.memory_space<vmem>>
      %158 = tpu.memref_squeeze %157 : memref<1x1x128xf32, #tpu.memory_space<vmem>> -> memref<1x128xf32, #tpu.memory_space<vmem>>
      %159 = tpu.memref_slice %arg5[%111, %c5_i32_111] : memref<2x16x!tpu.dma_semaphore, #tpu.memory_space<semaphore_mem>> -> memref<1x1x!tpu.dma_semaphore, #tpu.memory_space<semaphore_mem>>
      %160 = tpu.memref_squeeze %159 : memref<1x1x!tpu.dma_semaphore, #tpu.memory_space<semaphore_mem>> -> memref<!tpu.dma_semaphore, #tpu.memory_space<semaphore_mem>>
      tpu.enqueue_dma source(%156 : memref<1x128xf32, #tpu.memory_space<any>>) target(%158 : memref<1x128xf32, #tpu.memory_space<vmem>>) target_semaphore(%160 : memref<!tpu.dma_semaphore, #tpu.memory_space<semaphore_mem>>)
      %c6_i32_115 = arith.constant 6 : i32
      %161 = arith.addi %112, %c6_i32_115 : i32
      %162 = arith.index_cast %161 : i32 to index
      %163 = memref.load %arg1[%162] : memref<16xi32, #tpu.memory_space<smem>>
      %c6_i32_116 = arith.constant 6 : i32
      %c0_i32_117 = arith.constant 0 : i32
      %164 = tpu.memref_slice %arg2[%163, %c0_i32_117] : memref<16x128xf32, #tpu.memory_space<any>> -> memref<1x128xf32, #tpu.memory_space<any>>
      %c6_i32_118 = arith.constant 6 : i32
      %c0_i32_119 = arith.constant 0 : i32
      %165 = tpu.memref_slice %arg4[%111, %c6_i32_118, %c0_i32_119] : memref<2x16x128xf32, #tpu.memory_space<vmem>> -> memref<1x1x128xf32, #tpu.memory_space<vmem>>
      %166 = tpu.memref_squeeze %165 : memref<1x1x128xf32, #tpu.memory_space<vmem>> -> memref<1x128xf32, #tpu.memory_space<vmem>>
      %167 = tpu.memref_slice %arg5[%111, %c6_i32_116] : memref<2x16x!tpu.dma_semaphore, #tpu.memory_space<semaphore_mem>> -> memref<1x1x!tpu.dma_semaphore, #tpu.memory_space<semaphore_mem>>
      %168 = tpu.memref_squeeze %167 : memref<1x1x!tpu.dma_semaphore, #tpu.memory_space<semaphore_mem>> -> memref<!tpu.dma_semaphore, #tpu.memory_space<semaphore_mem>>
      tpu.enqueue_dma source(%164 : memref<1x128xf32, #tpu.memory_space<any>>) target(%166 : memref<1x128xf32, #tpu.memory_space<vmem>>) target_semaphore(%168 : memref<!tpu.dma_semaphore, #tpu.memory_space<semaphore_mem>>)
      %c7_i32_120 = arith.constant 7 : i32
      %169 = arith.addi %112, %c7_i32_120 : i32
      %170 = arith.index_cast %169 : i32 to index
      %171 = memref.load %arg1[%170] : memref<16xi32, #tpu.memory_space<smem>>
      %c7_i32_121 = arith.constant 7 : i32
      %c0_i32_122 = arith.constant 0 : i32
      %172 = tpu.memref_slice %arg2[%171, %c0_i32_122] : memref<16x128xf32, #tpu.memory_space<any>> -> memref<1x128xf32, #tpu.memory_space<any>>
      %c7_i32_123 = arith.constant 7 : i32
      %c0_i32_124 = arith.constant 0 : i32
      %173 = tpu.memref_slice %arg4[%111, %c7_i32_123, %c0_i32_124] : memref<2x16x128xf32, #tpu.memory_space<vmem>> -> memref<1x1x128xf32, #tpu.memory_space<vmem>>
      %174 = tpu.memref_squeeze %173 : memref<1x1x128xf32, #tpu.memory_space<vmem>> -> memref<1x128xf32, #tpu.memory_space<vmem>>
      %175 = tpu.memref_slice %arg5[%111, %c7_i32_121] : memref<2x16x!tpu.dma_semaphore, #tpu.memory_space<semaphore_mem>> -> memref<1x1x!tpu.dma_semaphore, #tpu.memory_space<semaphore_mem>>
      %176 = tpu.memref_squeeze %175 : memref<1x1x!tpu.dma_semaphore, #tpu.memory_space<semaphore_mem>> -> memref<!tpu.dma_semaphore, #tpu.memory_space<semaphore_mem>>
      tpu.enqueue_dma source(%172 : memref<1x128xf32, #tpu.memory_space<any>>) target(%174 : memref<1x128xf32, #tpu.memory_space<vmem>>) target_semaphore(%176 : memref<!tpu.dma_semaphore, #tpu.memory_space<semaphore_mem>>)
      %c8_i32_125 = arith.constant 8 : i32
      %177 = arith.addi %112, %c8_i32_125 : i32
      %178 = arith.index_cast %177 : i32 to index
      %179 = memref.load %arg1[%178] : memref<16xi32, #tpu.memory_space<smem>>
      %c8_i32_126 = arith.constant 8 : i32
      %c0_i32_127 = arith.constant 0 : i32
      %180 = tpu.memref_slice %arg2[%179, %c0_i32_127] : memref<16x128xf32, #tpu.memory_space<any>> -> memref<1x128xf32, #tpu.memory_space<any>>
      %c8_i32_128 = arith.constant 8 : i32
      %c0_i32_129 = arith.constant 0 : i32
      %181 = tpu.memref_slice %arg4[%111, %c8_i32_128, %c0_i32_129] : memref<2x16x128xf32, #tpu.memory_space<vmem>> -> memref<1x1x128xf32, #tpu.memory_space<vmem>>
      %182 = tpu.memref_squeeze %181 : memref<1x1x128xf32, #tpu.memory_space<vmem>> -> memref<1x128xf32, #tpu.memory_space<vmem>>
      %183 = tpu.memref_slice %arg5[%111, %c8_i32_126] : memref<2x16x!tpu.dma_semaphore, #tpu.memory_space<semaphore_mem>> -> memref<1x1x!tpu.dma_semaphore, #tpu.memory_space<semaphore_mem>>
      %184 = tpu.memref_squeeze %183 : memref<1x1x!tpu.dma_semaphore, #tpu.memory_space<semaphore_mem>> -> memref<!tpu.dma_semaphore, #tpu.memory_space<semaphore_mem>>
      tpu.enqueue_dma source(%180 : memref<1x128xf32, #tpu.memory_space<any>>) target(%182 : memref<1x128xf32, #tpu.memory_space<vmem>>) target_semaphore(%184 : memref<!tpu.dma_semaphore, #tpu.memory_space<semaphore_mem>>)
      %c9_i32_130 = arith.constant 9 : i32
      %185 = arith.addi %112, %c9_i32_130 : i32
      %186 = arith.index_cast %185 : i32 to index
      %187 = memref.load %arg1[%186] : memref<16xi32, #tpu.memory_space<smem>>
      %c9_i32_131 = arith.constant 9 : i32
      %c0_i32_132 = arith.constant 0 : i32
      %188 = tpu.memref_slice %arg2[%187, %c0_i32_132] : memref<16x128xf32, #tpu.memory_space<any>> -> memref<1x128xf32, #tpu.memory_space<any>>
      %c9_i32_133 = arith.constant 9 : i32
      %c0_i32_134 = arith.constant 0 : i32
      %189 = tpu.memref_slice %arg4[%111, %c9_i32_133, %c0_i32_134] : memref<2x16x128xf32, #tpu.memory_space<vmem>> -> memref<1x1x128xf32, #tpu.memory_space<vmem>>
      %190 = tpu.memref_squeeze %189 : memref<1x1x128xf32, #tpu.memory_space<vmem>> -> memref<1x128xf32, #tpu.memory_space<vmem>>
      %191 = tpu.memref_slice %arg5[%111, %c9_i32_131] : memref<2x16x!tpu.dma_semaphore, #tpu.memory_space<semaphore_mem>> -> memref<1x1x!tpu.dma_semaphore, #tpu.memory_space<semaphore_mem>>
      %192 = tpu.memref_squeeze %191 : memref<1x1x!tpu.dma_semaphore, #tpu.memory_space<semaphore_mem>> -> memref<!tpu.dma_semaphore, #tpu.memory_space<semaphore_mem>>
      tpu.enqueue_dma source(%188 : memref<1x128xf32, #tpu.memory_space<any>>) target(%190 : memref<1x128xf32, #tpu.memory_space<vmem>>) target_semaphore(%192 : memref<!tpu.dma_semaphore, #tpu.memory_space<semaphore_mem>>)
      %c10_i32_135 = arith.constant 10 : i32
      %193 = arith.addi %112, %c10_i32_135 : i32
      %194 = arith.index_cast %193 : i32 to index
      %195 = memref.load %arg1[%194] : memref<16xi32, #tpu.memory_space<smem>>
      %c10_i32_136 = arith.constant 10 : i32
      %c0_i32_137 = arith.constant 0 : i32
      %196 = tpu.memref_slice %arg2[%195, %c0_i32_137] : memref<16x128xf32, #tpu.memory_space<any>> -> memref<1x128xf32, #tpu.memory_space<any>>
      %c10_i32_138 = arith.constant 10 : i32
      %c0_i32_139 = arith.constant 0 : i32
      %197 = tpu.memref_slice %arg4[%111, %c10_i32_138, %c0_i32_139] : memref<2x16x128xf32, #tpu.memory_space<vmem>> -> memref<1x1x128xf32, #tpu.memory_space<vmem>>
      %198 = tpu.memref_squeeze %197 : memref<1x1x128xf32, #tpu.memory_space<vmem>> -> memref<1x128xf32, #tpu.memory_space<vmem>>
      %199 = tpu.memref_slice %arg5[%111, %c10_i32_136] : memref<2x16x!tpu.dma_semaphore, #tpu.memory_space<semaphore_mem>> -> memref<1x1x!tpu.dma_semaphore, #tpu.memory_space<semaphore_mem>>
      %200 = tpu.memref_squeeze %199 : memref<1x1x!tpu.dma_semaphore, #tpu.memory_space<semaphore_mem>> -> memref<!tpu.dma_semaphore, #tpu.memory_space<semaphore_mem>>
      tpu.enqueue_dma source(%196 : memref<1x128xf32, #tpu.memory_space<any>>) target(%198 : memref<1x128xf32, #tpu.memory_space<vmem>>) target_semaphore(%200 : memref<!tpu.dma_semaphore, #tpu.memory_space<semaphore_mem>>)
      %c11_i32_140 = arith.constant 11 : i32
      %201 = arith.addi %112, %c11_i32_140 : i32
      %202 = arith.index_cast %201 : i32 to index
      %203 = memref.load %arg1[%202] : memref<16xi32, #tpu.memory_space<smem>>
      %c11_i32_141 = arith.constant 11 : i32
      %c0_i32_142 = arith.constant 0 : i32
      %204 = tpu.memref_slice %arg2[%203, %c0_i32_142] : memref<16x128xf32, #tpu.memory_space<any>> -> memref<1x128xf32, #tpu.memory_space<any>>
      %c11_i32_143 = arith.constant 11 : i32
      %c0_i32_144 = arith.constant 0 : i32
      %205 = tpu.memref_slice %arg4[%111, %c11_i32_143, %c0_i32_144] : memref<2x16x128xf32, #tpu.memory_space<vmem>> -> memref<1x1x128xf32, #tpu.memory_space<vmem>>
      %206 = tpu.memref_squeeze %205 : memref<1x1x128xf32, #tpu.memory_space<vmem>> -> memref<1x128xf32, #tpu.memory_space<vmem>>
      %207 = tpu.memref_slice %arg5[%111, %c11_i32_141] : memref<2x16x!tpu.dma_semaphore, #tpu.memory_space<semaphore_mem>> -> memref<1x1x!tpu.dma_semaphore, #tpu.memory_space<semaphore_mem>>
      %208 = tpu.memref_squeeze %207 : memref<1x1x!tpu.dma_semaphore, #tpu.memory_space<semaphore_mem>> -> memref<!tpu.dma_semaphore, #tpu.memory_space<semaphore_mem>>
      tpu.enqueue_dma source(%204 : memref<1x128xf32, #tpu.memory_space<any>>) target(%206 : memref<1x128xf32, #tpu.memory_space<vmem>>) target_semaphore(%208 : memref<!tpu.dma_semaphore, #tpu.memory_space<semaphore_mem>>)
      %c12_i32_145 = arith.constant 12 : i32
      %209 = arith.addi %112, %c12_i32_145 : i32
      %210 = arith.index_cast %209 : i32 to index
      %211 = memref.load %arg1[%210] : memref<16xi32, #tpu.memory_space<smem>>
      %c12_i32_146 = arith.constant 12 : i32
      %c0_i32_147 = arith.constant 0 : i32
      %212 = tpu.memref_slice %arg2[%211, %c0_i32_147] : memref<16x128xf32, #tpu.memory_space<any>> -> memref<1x128xf32, #tpu.memory_space<any>>
      %c12_i32_148 = arith.constant 12 : i32
      %c0_i32_149 = arith.constant 0 : i32
      %213 = tpu.memref_slice %arg4[%111, %c12_i32_148, %c0_i32_149] : memref<2x16x128xf32, #tpu.memory_space<vmem>> -> memref<1x1x128xf32, #tpu.memory_space<vmem>>
      %214 = tpu.memref_squeeze %213 : memref<1x1x128xf32, #tpu.memory_space<vmem>> -> memref<1x128xf32, #tpu.memory_space<vmem>>
      %215 = tpu.memref_slice %arg5[%111, %c12_i32_146] : memref<2x16x!tpu.dma_semaphore, #tpu.memory_space<semaphore_mem>> -> memref<1x1x!tpu.dma_semaphore, #tpu.memory_space<semaphore_mem>>
      %216 = tpu.memref_squeeze %215 : memref<1x1x!tpu.dma_semaphore, #tpu.memory_space<semaphore_mem>> -> memref<!tpu.dma_semaphore, #tpu.memory_space<semaphore_mem>>
      tpu.enqueue_dma source(%212 : memref<1x128xf32, #tpu.memory_space<any>>) target(%214 : memref<1x128xf32, #tpu.memory_space<vmem>>) target_semaphore(%216 : memref<!tpu.dma_semaphore, #tpu.memory_space<semaphore_mem>>)
      %c13_i32_150 = arith.constant 13 : i32
      %217 = arith.addi %112, %c13_i32_150 : i32
      %218 = arith.index_cast %217 : i32 to index
      %219 = memref.load %arg1[%218] : memref<16xi32, #tpu.memory_space<smem>>
      %c13_i32_151 = arith.constant 13 : i32
      %c0_i32_152 = arith.constant 0 : i32
      %220 = tpu.memref_slice %arg2[%219, %c0_i32_152] : memref<16x128xf32, #tpu.memory_space<any>> -> memref<1x128xf32, #tpu.memory_space<any>>
      %c13_i32_153 = arith.constant 13 : i32
      %c0_i32_154 = arith.constant 0 : i32
      %221 = tpu.memref_slice %arg4[%111, %c13_i32_153, %c0_i32_154] : memref<2x16x128xf32, #tpu.memory_space<vmem>> -> memref<1x1x128xf32, #tpu.memory_space<vmem>>
      %222 = tpu.memref_squeeze %221 : memref<1x1x128xf32, #tpu.memory_space<vmem>> -> memref<1x128xf32, #tpu.memory_space<vmem>>
      %223 = tpu.memref_slice %arg5[%111, %c13_i32_151] : memref<2x16x!tpu.dma_semaphore, #tpu.memory_space<semaphore_mem>> -> memref<1x1x!tpu.dma_semaphore, #tpu.memory_space<semaphore_mem>>
      %224 = tpu.memref_squeeze %223 : memref<1x1x!tpu.dma_semaphore, #tpu.memory_space<semaphore_mem>> -> memref<!tpu.dma_semaphore, #tpu.memory_space<semaphore_mem>>
      tpu.enqueue_dma source(%220 : memref<1x128xf32, #tpu.memory_space<any>>) target(%222 : memref<1x128xf32, #tpu.memory_space<vmem>>) target_semaphore(%224 : memref<!tpu.dma_semaphore, #tpu.memory_space<semaphore_mem>>)
      %c14_i32_155 = arith.constant 14 : i32
      %225 = arith.addi %112, %c14_i32_155 : i32
      %226 = arith.index_cast %225 : i32 to index
      %227 = memref.load %arg1[%226] : memref<16xi32, #tpu.memory_space<smem>>
      %c14_i32_156 = arith.constant 14 : i32
      %c0_i32_157 = arith.constant 0 : i32
      %228 = tpu.memref_slice %arg2[%227, %c0_i32_157] : memref<16x128xf32, #tpu.memory_space<any>> -> memref<1x128xf32, #tpu.memory_space<any>>
      %c14_i32_158 = arith.constant 14 : i32
      %c0_i32_159 = arith.constant 0 : i32
      %229 = tpu.memref_slice %arg4[%111, %c14_i32_158, %c0_i32_159] : memref<2x16x128xf32, #tpu.memory_space<vmem>> -> memref<1x1x128xf32, #tpu.memory_space<vmem>>
      %230 = tpu.memref_squeeze %229 : memref<1x1x128xf32, #tpu.memory_space<vmem>> -> memref<1x128xf32, #tpu.memory_space<vmem>>
      %231 = tpu.memref_slice %arg5[%111, %c14_i32_156] : memref<2x16x!tpu.dma_semaphore, #tpu.memory_space<semaphore_mem>> -> memref<1x1x!tpu.dma_semaphore, #tpu.memory_space<semaphore_mem>>
      %232 = tpu.memref_squeeze %231 : memref<1x1x!tpu.dma_semaphore, #tpu.memory_space<semaphore_mem>> -> memref<!tpu.dma_semaphore, #tpu.memory_space<semaphore_mem>>
      tpu.enqueue_dma source(%228 : memref<1x128xf32, #tpu.memory_space<any>>) target(%230 : memref<1x128xf32, #tpu.memory_space<vmem>>) target_semaphore(%232 : memref<!tpu.dma_semaphore, #tpu.memory_space<semaphore_mem>>)
      %c15_i32_160 = arith.constant 15 : i32
      %233 = arith.addi %112, %c15_i32_160 : i32
      %234 = arith.index_cast %233 : i32 to index
      %235 = memref.load %arg1[%234] : memref<16xi32, #tpu.memory_space<smem>>
      %c15_i32_161 = arith.constant 15 : i32
      %c0_i32_162 = arith.constant 0 : i32
      %236 = tpu.memref_slice %arg2[%235, %c0_i32_162] : memref<16x128xf32, #tpu.memory_space<any>> -> memref<1x128xf32, #tpu.memory_space<any>>
      %c15_i32_163 = arith.constant 15 : i32
      %c0_i32_164 = arith.constant 0 : i32
      %237 = tpu.memref_slice %arg4[%111, %c15_i32_163, %c0_i32_164] : memref<2x16x128xf32, #tpu.memory_space<vmem>> -> memref<1x1x128xf32, #tpu.memory_space<vmem>>
      %238 = tpu.memref_squeeze %237 : memref<1x1x128xf32, #tpu.memory_space<vmem>> -> memref<1x128xf32, #tpu.memory_space<vmem>>
      %239 = tpu.memref_slice %arg5[%111, %c15_i32_161] : memref<2x16x!tpu.dma_semaphore, #tpu.memory_space<semaphore_mem>> -> memref<1x1x!tpu.dma_semaphore, #tpu.memory_space<semaphore_mem>>
      %240 = tpu.memref_squeeze %239 : memref<1x1x!tpu.dma_semaphore, #tpu.memory_space<semaphore_mem>> -> memref<!tpu.dma_semaphore, #tpu.memory_space<semaphore_mem>>
      tpu.enqueue_dma source(%236 : memref<1x128xf32, #tpu.memory_space<any>>) target(%238 : memref<1x128xf32, #tpu.memory_space<vmem>>) target_semaphore(%240 : memref<!tpu.dma_semaphore, #tpu.memory_space<semaphore_mem>>)
    } else {
    }
    %c2_i32 = arith.constant 2 : i32
    %c0_i32_3 = arith.constant 0 : i32
    %7 = arith.cmpi eq, %c2_i32, %c0_i32_3 : i32
    %c1_i32_4 = arith.constant 1 : i32
    %8 = arith.select %7, %c1_i32_4, %c2_i32 : i32
    %9 = arith.remsi %arg0, %8 : i32
    %c0_i32_5 = arith.constant 0 : i32
    %10 = arith.cmpi ne, %9, %c0_i32_5 : i32
    %c0_i32_6 = arith.constant 0 : i32
    %11 = arith.cmpi slt, %9, %c0_i32_6 : i32
    %c0_i32_7 = arith.constant 0 : i32
    %12 = arith.cmpi slt, %8, %c0_i32_7 : i32
    %13 = arith.xori %11, %12 : i1
    %14 = arith.andi %13, %10 : i1
    %15 = arith.addi %9, %8 : i32
    %16 = arith.select %14, %15, %9 : i32
    %c0_i32_8 = arith.constant 0 : i32
    %c0_i32_9 = arith.constant 0 : i32
    %c0_i32_10 = arith.constant 0 : i32
    %17 = tpu.memref_slice %arg2[%c0_i32_9, %c0_i32_10] : memref<16x128xf32, #tpu.memory_space<any>> -> memref<1x128xf32, #tpu.memory_space<any>>
    %c0_i32_11 = arith.constant 0 : i32
    %c0_i32_12 = arith.constant 0 : i32
    %18 = tpu.memref_slice %arg4[%16, %c0_i32_11, %c0_i32_12] : memref<2x16x128xf32, #tpu.memory_space<vmem>> -> memref<1x1x128xf32, #tpu.memory_space<vmem>>
    %19 = tpu.memref_squeeze %18 : memref<1x1x128xf32, #tpu.memory_space<vmem>> -> memref<1x128xf32, #tpu.memory_space<vmem>>
    %20 = tpu.memref_slice %arg5[%16, %c0_i32_8] : memref<2x16x!tpu.dma_semaphore, #tpu.memory_space<semaphore_mem>> -> memref<1x1x!tpu.dma_semaphore, #tpu.memory_space<semaphore_mem>>
    %21 = tpu.memref_squeeze %20 : memref<1x1x!tpu.dma_semaphore, #tpu.memory_space<semaphore_mem>> -> memref<!tpu.dma_semaphore, #tpu.memory_space<semaphore_mem>>
    tpu.wait_dma2 semaphore(%21 : memref<!tpu.dma_semaphore, #tpu.memory_space<semaphore_mem>>) src(%17 : memref<1x128xf32, #tpu.memory_space<any>>) dst(%19 : memref<1x128xf32, #tpu.memory_space<vmem>>)
    %c1_i32_13 = arith.constant 1 : i32
    %c0_i32_14 = arith.constant 0 : i32
    %c0_i32_15 = arith.constant 0 : i32
    %22 = tpu.memref_slice %arg2[%c0_i32_14, %c0_i32_15] : memref<16x128xf32, #tpu.memory_space<any>> -> memref<1x128xf32, #tpu.memory_space<any>>
    %c1_i32_16 = arith.constant 1 : i32
    %c0_i32_17 = arith.constant 0 : i32
    %23 = tpu.memref_slice %arg4[%16, %c1_i32_16, %c0_i32_17] : memref<2x16x128xf32, #tpu.memory_space<vmem>> -> memref<1x1x128xf32, #tpu.memory_space<vmem>>
    %24 = tpu.memref_squeeze %23 : memref<1x1x128xf32, #tpu.memory_space<vmem>> -> memref<1x128xf32, #tpu.memory_space<vmem>>
    %25 = tpu.memref_slice %arg5[%16, %c1_i32_13] : memref<2x16x!tpu.dma_semaphore, #tpu.memory_space<semaphore_mem>> -> memref<1x1x!tpu.dma_semaphore, #tpu.memory_space<semaphore_mem>>
    %26 = tpu.memref_squeeze %25 : memref<1x1x!tpu.dma_semaphore, #tpu.memory_space<semaphore_mem>> -> memref<!tpu.dma_semaphore, #tpu.memory_space<semaphore_mem>>
    tpu.wait_dma2 semaphore(%26 : memref<!tpu.dma_semaphore, #tpu.memory_space<semaphore_mem>>) src(%22 : memref<1x128xf32, #tpu.memory_space<any>>) dst(%24 : memref<1x128xf32, #tpu.memory_space<vmem>>)
    %c2_i32_18 = arith.constant 2 : i32
    %c0_i32_19 = arith.constant 0 : i32
    %c0_i32_20 = arith.constant 0 : i32
    %27 = tpu.memref_slice %arg2[%c0_i32_19, %c0_i32_20] : memref<16x128xf32, #tpu.memory_space<any>> -> memref<1x128xf32, #tpu.memory_space<any>>
    %c2_i32_21 = arith.constant 2 : i32
    %c0_i32_22 = arith.constant 0 : i32
    %28 = tpu.memref_slice %arg4[%16, %c2_i32_21, %c0_i32_22] : memref<2x16x128xf32, #tpu.memory_space<vmem>> -> memref<1x1x128xf32, #tpu.memory_space<vmem>>
    %29 = tpu.memref_squeeze %28 : memref<1x1x128xf32, #tpu.memory_space<vmem>> -> memref<1x128xf32, #tpu.memory_space<vmem>>
    %30 = tpu.memref_slice %arg5[%16, %c2_i32_18] : memref<2x16x!tpu.dma_semaphore, #tpu.memory_space<semaphore_mem>> -> memref<1x1x!tpu.dma_semaphore, #tpu.memory_space<semaphore_mem>>
    %31 = tpu.memref_squeeze %30 : memref<1x1x!tpu.dma_semaphore, #tpu.memory_space<semaphore_mem>> -> memref<!tpu.dma_semaphore, #tpu.memory_space<semaphore_mem>>
    tpu.wait_dma2 semaphore(%31 : memref<!tpu.dma_semaphore, #tpu.memory_space<semaphore_mem>>) src(%27 : memref<1x128xf32, #tpu.memory_space<any>>) dst(%29 : memref<1x128xf32, #tpu.memory_space<vmem>>)
    %c3_i32 = arith.constant 3 : i32
    %c0_i32_23 = arith.constant 0 : i32
    %c0_i32_24 = arith.constant 0 : i32
    %32 = tpu.memref_slice %arg2[%c0_i32_23, %c0_i32_24] : memref<16x128xf32, #tpu.memory_space<any>> -> memref<1x128xf32, #tpu.memory_space<any>>
    %c3_i32_25 = arith.constant 3 : i32
    %c0_i32_26 = arith.constant 0 : i32
    %33 = tpu.memref_slice %arg4[%16, %c3_i32_25, %c0_i32_26] : memref<2x16x128xf32, #tpu.memory_space<vmem>> -> memref<1x1x128xf32, #tpu.memory_space<vmem>>
    %34 = tpu.memref_squeeze %33 : memref<1x1x128xf32, #tpu.memory_space<vmem>> -> memref<1x128xf32, #tpu.memory_space<vmem>>
    %35 = tpu.memref_slice %arg5[%16, %c3_i32] : memref<2x16x!tpu.dma_semaphore, #tpu.memory_space<semaphore_mem>> -> memref<1x1x!tpu.dma_semaphore, #tpu.memory_space<semaphore_mem>>
    %36 = tpu.memref_squeeze %35 : memref<1x1x!tpu.dma_semaphore, #tpu.memory_space<semaphore_mem>> -> memref<!tpu.dma_semaphore, #tpu.memory_space<semaphore_mem>>
    tpu.wait_dma2 semaphore(%36 : memref<!tpu.dma_semaphore, #tpu.memory_space<semaphore_mem>>) src(%32 : memref<1x128xf32, #tpu.memory_space<any>>) dst(%34 : memref<1x128xf32, #tpu.memory_space<vmem>>)
    %c4_i32 = arith.constant 4 : i32
    %c0_i32_27 = arith.constant 0 : i32
    %c0_i32_28 = arith.constant 0 : i32
    %37 = tpu.memref_slice %arg2[%c0_i32_27, %c0_i32_28] : memref<16x128xf32, #tpu.memory_space<any>> -> memref<1x128xf32, #tpu.memory_space<any>>
    %c4_i32_29 = arith.constant 4 : i32
    %c0_i32_30 = arith.constant 0 : i32
    %38 = tpu.memref_slice %arg4[%16, %c4_i32_29, %c0_i32_30] : memref<2x16x128xf32, #tpu.memory_space<vmem>> -> memref<1x1x128xf32, #tpu.memory_space<vmem>>
    %39 = tpu.memref_squeeze %38 : memref<1x1x128xf32, #tpu.memory_space<vmem>> -> memref<1x128xf32, #tpu.memory_space<vmem>>
    %40 = tpu.memref_slice %arg5[%16, %c4_i32] : memref<2x16x!tpu.dma_semaphore, #tpu.memory_space<semaphore_mem>> -> memref<1x1x!tpu.dma_semaphore, #tpu.memory_space<semaphore_mem>>
    %41 = tpu.memref_squeeze %40 : memref<1x1x!tpu.dma_semaphore, #tpu.memory_space<semaphore_mem>> -> memref<!tpu.dma_semaphore, #tpu.memory_space<semaphore_mem>>
    tpu.wait_dma2 semaphore(%41 : memref<!tpu.dma_semaphore, #tpu.memory_space<semaphore_mem>>) src(%37 : memref<1x128xf32, #tpu.memory_space<any>>) dst(%39 : memref<1x128xf32, #tpu.memory_space<vmem>>)
    %c5_i32 = arith.constant 5 : i32
    %c0_i32_31 = arith.constant 0 : i32
    %c0_i32_32 = arith.constant 0 : i32
    %42 = tpu.memref_slice %arg2[%c0_i32_31, %c0_i32_32] : memref<16x128xf32, #tpu.memory_space<any>> -> memref<1x128xf32, #tpu.memory_space<any>>
    %c5_i32_33 = arith.constant 5 : i32
    %c0_i32_34 = arith.constant 0 : i32
    %43 = tpu.memref_slice %arg4[%16, %c5_i32_33, %c0_i32_34] : memref<2x16x128xf32, #tpu.memory_space<vmem>> -> memref<1x1x128xf32, #tpu.memory_space<vmem>>
    %44 = tpu.memref_squeeze %43 : memref<1x1x128xf32, #tpu.memory_space<vmem>> -> memref<1x128xf32, #tpu.memory_space<vmem>>
    %45 = tpu.memref_slice %arg5[%16, %c5_i32] : memref<2x16x!tpu.dma_semaphore, #tpu.memory_space<semaphore_mem>> -> memref<1x1x!tpu.dma_semaphore, #tpu.memory_space<semaphore_mem>>
    %46 = tpu.memref_squeeze %45 : memref<1x1x!tpu.dma_semaphore, #tpu.memory_space<semaphore_mem>> -> memref<!tpu.dma_semaphore, #tpu.memory_space<semaphore_mem>>
    tpu.wait_dma2 semaphore(%46 : memref<!tpu.dma_semaphore, #tpu.memory_space<semaphore_mem>>) src(%42 : memref<1x128xf32, #tpu.memory_space<any>>) dst(%44 : memref<1x128xf32, #tpu.memory_space<vmem>>)
    %c6_i32 = arith.constant 6 : i32
    %c0_i32_35 = arith.constant 0 : i32
    %c0_i32_36 = arith.constant 0 : i32
    %47 = tpu.memref_slice %arg2[%c0_i32_35, %c0_i32_36] : memref<16x128xf32, #tpu.memory_space<any>> -> memref<1x128xf32, #tpu.memory_space<any>>
    %c6_i32_37 = arith.constant 6 : i32
    %c0_i32_38 = arith.constant 0 : i32
    %48 = tpu.memref_slice %arg4[%16, %c6_i32_37, %c0_i32_38] : memref<2x16x128xf32, #tpu.memory_space<vmem>> -> memref<1x1x128xf32, #tpu.memory_space<vmem>>
    %49 = tpu.memref_squeeze %48 : memref<1x1x128xf32, #tpu.memory_space<vmem>> -> memref<1x128xf32, #tpu.memory_space<vmem>>
    %50 = tpu.memref_slice %arg5[%16, %c6_i32] : memref<2x16x!tpu.dma_semaphore, #tpu.memory_space<semaphore_mem>> -> memref<1x1x!tpu.dma_semaphore, #tpu.memory_space<semaphore_mem>>
    %51 = tpu.memref_squeeze %50 : memref<1x1x!tpu.dma_semaphore, #tpu.memory_space<semaphore_mem>> -> memref<!tpu.dma_semaphore, #tpu.memory_space<semaphore_mem>>
    tpu.wait_dma2 semaphore(%51 : memref<!tpu.dma_semaphore, #tpu.memory_space<semaphore_mem>>) src(%47 : memref<1x128xf32, #tpu.memory_space<any>>) dst(%49 : memref<1x128xf32, #tpu.memory_space<vmem>>)
    %c7_i32 = arith.constant 7 : i32
    %c0_i32_39 = arith.constant 0 : i32
    %c0_i32_40 = arith.constant 0 : i32
    %52 = tpu.memref_slice %arg2[%c0_i32_39, %c0_i32_40] : memref<16x128xf32, #tpu.memory_space<any>> -> memref<1x128xf32, #tpu.memory_space<any>>
    %c7_i32_41 = arith.constant 7 : i32
    %c0_i32_42 = arith.constant 0 : i32
    %53 = tpu.memref_slice %arg4[%16, %c7_i32_41, %c0_i32_42] : memref<2x16x128xf32, #tpu.memory_space<vmem>> -> memref<1x1x128xf32, #tpu.memory_space<vmem>>
    %54 = tpu.memref_squeeze %53 : memref<1x1x128xf32, #tpu.memory_space<vmem>> -> memref<1x128xf32, #tpu.memory_space<vmem>>
    %55 = tpu.memref_slice %arg5[%16, %c7_i32] : memref<2x16x!tpu.dma_semaphore, #tpu.memory_space<semaphore_mem>> -> memref<1x1x!tpu.dma_semaphore, #tpu.memory_space<semaphore_mem>>
    %56 = tpu.memref_squeeze %55 : memref<1x1x!tpu.dma_semaphore, #tpu.memory_space<semaphore_mem>> -> memref<!tpu.dma_semaphore, #tpu.memory_space<semaphore_mem>>
    tpu.wait_dma2 semaphore(%56 : memref<!tpu.dma_semaphore, #tpu.memory_space<semaphore_mem>>) src(%52 : memref<1x128xf32, #tpu.memory_space<any>>) dst(%54 : memref<1x128xf32, #tpu.memory_space<vmem>>)
    %c8_i32 = arith.constant 8 : i32
    %c0_i32_43 = arith.constant 0 : i32
    %c0_i32_44 = arith.constant 0 : i32
    %57 = tpu.memref_slice %arg2[%c0_i32_43, %c0_i32_44] : memref<16x128xf32, #tpu.memory_space<any>> -> memref<1x128xf32, #tpu.memory_space<any>>
    %c8_i32_45 = arith.constant 8 : i32
    %c0_i32_46 = arith.constant 0 : i32
    %58 = tpu.memref_slice %arg4[%16, %c8_i32_45, %c0_i32_46] : memref<2x16x128xf32, #tpu.memory_space<vmem>> -> memref<1x1x128xf32, #tpu.memory_space<vmem>>
    %59 = tpu.memref_squeeze %58 : memref<1x1x128xf32, #tpu.memory_space<vmem>> -> memref<1x128xf32, #tpu.memory_space<vmem>>
    %60 = tpu.memref_slice %arg5[%16, %c8_i32] : memref<2x16x!tpu.dma_semaphore, #tpu.memory_space<semaphore_mem>> -> memref<1x1x!tpu.dma_semaphore, #tpu.memory_space<semaphore_mem>>
    %61 = tpu.memref_squeeze %60 : memref<1x1x!tpu.dma_semaphore, #tpu.memory_space<semaphore_mem>> -> memref<!tpu.dma_semaphore, #tpu.memory_space<semaphore_mem>>
    tpu.wait_dma2 semaphore(%61 : memref<!tpu.dma_semaphore, #tpu.memory_space<semaphore_mem>>) src(%57 : memref<1x128xf32, #tpu.memory_space<any>>) dst(%59 : memref<1x128xf32, #tpu.memory_space<vmem>>)
    %c9_i32 = arith.constant 9 : i32
    %c0_i32_47 = arith.constant 0 : i32
    %c0_i32_48 = arith.constant 0 : i32
    %62 = tpu.memref_slice %arg2[%c0_i32_47, %c0_i32_48] : memref<16x128xf32, #tpu.memory_space<any>> -> memref<1x128xf32, #tpu.memory_space<any>>
    %c9_i32_49 = arith.constant 9 : i32
    %c0_i32_50 = arith.constant 0 : i32
    %63 = tpu.memref_slice %arg4[%16, %c9_i32_49, %c0_i32_50] : memref<2x16x128xf32, #tpu.memory_space<vmem>> -> memref<1x1x128xf32, #tpu.memory_space<vmem>>
    %64 = tpu.memref_squeeze %63 : memref<1x1x128xf32, #tpu.memory_space<vmem>> -> memref<1x128xf32, #tpu.memory_space<vmem>>
    %65 = tpu.memref_slice %arg5[%16, %c9_i32] : memref<2x16x!tpu.dma_semaphore, #tpu.memory_space<semaphore_mem>> -> memref<1x1x!tpu.dma_semaphore, #tpu.memory_space<semaphore_mem>>
    %66 = tpu.memref_squeeze %65 : memref<1x1x!tpu.dma_semaphore, #tpu.memory_space<semaphore_mem>> -> memref<!tpu.dma_semaphore, #tpu.memory_space<semaphore_mem>>
    tpu.wait_dma2 semaphore(%66 : memref<!tpu.dma_semaphore, #tpu.memory_space<semaphore_mem>>) src(%62 : memref<1x128xf32, #tpu.memory_space<any>>) dst(%64 : memref<1x128xf32, #tpu.memory_space<vmem>>)
    %c10_i32 = arith.constant 10 : i32
    %c0_i32_51 = arith.constant 0 : i32
    %c0_i32_52 = arith.constant 0 : i32
    %67 = tpu.memref_slice %arg2[%c0_i32_51, %c0_i32_52] : memref<16x128xf32, #tpu.memory_space<any>> -> memref<1x128xf32, #tpu.memory_space<any>>
    %c10_i32_53 = arith.constant 10 : i32
    %c0_i32_54 = arith.constant 0 : i32
    %68 = tpu.memref_slice %arg4[%16, %c10_i32_53, %c0_i32_54] : memref<2x16x128xf32, #tpu.memory_space<vmem>> -> memref<1x1x128xf32, #tpu.memory_space<vmem>>
    %69 = tpu.memref_squeeze %68 : memref<1x1x128xf32, #tpu.memory_space<vmem>> -> memref<1x128xf32, #tpu.memory_space<vmem>>
    %70 = tpu.memref_slice %arg5[%16, %c10_i32] : memref<2x16x!tpu.dma_semaphore, #tpu.memory_space<semaphore_mem>> -> memref<1x1x!tpu.dma_semaphore, #tpu.memory_space<semaphore_mem>>
    %71 = tpu.memref_squeeze %70 : memref<1x1x!tpu.dma_semaphore, #tpu.memory_space<semaphore_mem>> -> memref<!tpu.dma_semaphore, #tpu.memory_space<semaphore_mem>>
    tpu.wait_dma2 semaphore(%71 : memref<!tpu.dma_semaphore, #tpu.memory_space<semaphore_mem>>) src(%67 : memref<1x128xf32, #tpu.memory_space<any>>) dst(%69 : memref<1x128xf32, #tpu.memory_space<vmem>>)
    %c11_i32 = arith.constant 11 : i32
    %c0_i32_55 = arith.constant 0 : i32
    %c0_i32_56 = arith.constant 0 : i32
    %72 = tpu.memref_slice %arg2[%c0_i32_55, %c0_i32_56] : memref<16x128xf32, #tpu.memory_space<any>> -> memref<1x128xf32, #tpu.memory_space<any>>
    %c11_i32_57 = arith.constant 11 : i32
    %c0_i32_58 = arith.constant 0 : i32
    %73 = tpu.memref_slice %arg4[%16, %c11_i32_57, %c0_i32_58] : memref<2x16x128xf32, #tpu.memory_space<vmem>> -> memref<1x1x128xf32, #tpu.memory_space<vmem>>
    %74 = tpu.memref_squeeze %73 : memref<1x1x128xf32, #tpu.memory_space<vmem>> -> memref<1x128xf32, #tpu.memory_space<vmem>>
    %75 = tpu.memref_slice %arg5[%16, %c11_i32] : memref<2x16x!tpu.dma_semaphore, #tpu.memory_space<semaphore_mem>> -> memref<1x1x!tpu.dma_semaphore, #tpu.memory_space<semaphore_mem>>
    %76 = tpu.memref_squeeze %75 : memref<1x1x!tpu.dma_semaphore, #tpu.memory_space<semaphore_mem>> -> memref<!tpu.dma_semaphore, #tpu.memory_space<semaphore_mem>>
    tpu.wait_dma2 semaphore(%76 : memref<!tpu.dma_semaphore, #tpu.memory_space<semaphore_mem>>) src(%72 : memref<1x128xf32, #tpu.memory_space<any>>) dst(%74 : memref<1x128xf32, #tpu.memory_space<vmem>>)
    %c12_i32 = arith.constant 12 : i32
    %c0_i32_59 = arith.constant 0 : i32
    %c0_i32_60 = arith.constant 0 : i32
    %77 = tpu.memref_slice %arg2[%c0_i32_59, %c0_i32_60] : memref<16x128xf32, #tpu.memory_space<any>> -> memref<1x128xf32, #tpu.memory_space<any>>
    %c12_i32_61 = arith.constant 12 : i32
    %c0_i32_62 = arith.constant 0 : i32
    %78 = tpu.memref_slice %arg4[%16, %c12_i32_61, %c0_i32_62] : memref<2x16x128xf32, #tpu.memory_space<vmem>> -> memref<1x1x128xf32, #tpu.memory_space<vmem>>
    %79 = tpu.memref_squeeze %78 : memref<1x1x128xf32, #tpu.memory_space<vmem>> -> memref<1x128xf32, #tpu.memory_space<vmem>>
    %80 = tpu.memref_slice %arg5[%16, %c12_i32] : memref<2x16x!tpu.dma_semaphore, #tpu.memory_space<semaphore_mem>> -> memref<1x1x!tpu.dma_semaphore, #tpu.memory_space<semaphore_mem>>
    %81 = tpu.memref_squeeze %80 : memref<1x1x!tpu.dma_semaphore, #tpu.memory_space<semaphore_mem>> -> memref<!tpu.dma_semaphore, #tpu.memory_space<semaphore_mem>>
    tpu.wait_dma2 semaphore(%81 : memref<!tpu.dma_semaphore, #tpu.memory_space<semaphore_mem>>) src(%77 : memref<1x128xf32, #tpu.memory_space<any>>) dst(%79 : memref<1x128xf32, #tpu.memory_space<vmem>>)
    %c13_i32 = arith.constant 13 : i32
    %c0_i32_63 = arith.constant 0 : i32
    %c0_i32_64 = arith.constant 0 : i32
    %82 = tpu.memref_slice %arg2[%c0_i32_63, %c0_i32_64] : memref<16x128xf32, #tpu.memory_space<any>> -> memref<1x128xf32, #tpu.memory_space<any>>
    %c13_i32_65 = arith.constant 13 : i32
    %c0_i32_66 = arith.constant 0 : i32
    %83 = tpu.memref_slice %arg4[%16, %c13_i32_65, %c0_i32_66] : memref<2x16x128xf32, #tpu.memory_space<vmem>> -> memref<1x1x128xf32, #tpu.memory_space<vmem>>
    %84 = tpu.memref_squeeze %83 : memref<1x1x128xf32, #tpu.memory_space<vmem>> -> memref<1x128xf32, #tpu.memory_space<vmem>>
    %85 = tpu.memref_slice %arg5[%16, %c13_i32] : memref<2x16x!tpu.dma_semaphore, #tpu.memory_space<semaphore_mem>> -> memref<1x1x!tpu.dma_semaphore, #tpu.memory_space<semaphore_mem>>
    %86 = tpu.memref_squeeze %85 : memref<1x1x!tpu.dma_semaphore, #tpu.memory_space<semaphore_mem>> -> memref<!tpu.dma_semaphore, #tpu.memory_space<semaphore_mem>>
    tpu.wait_dma2 semaphore(%86 : memref<!tpu.dma_semaphore, #tpu.memory_space<semaphore_mem>>) src(%82 : memref<1x128xf32, #tpu.memory_space<any>>) dst(%84 : memref<1x128xf32, #tpu.memory_space<vmem>>)
    %c14_i32 = arith.constant 14 : i32
    %c0_i32_67 = arith.constant 0 : i32
    %c0_i32_68 = arith.constant 0 : i32
    %87 = tpu.memref_slice %arg2[%c0_i32_67, %c0_i32_68] : memref<16x128xf32, #tpu.memory_space<any>> -> memref<1x128xf32, #tpu.memory_space<any>>
    %c14_i32_69 = arith.constant 14 : i32
    %c0_i32_70 = arith.constant 0 : i32
    %88 = tpu.memref_slice %arg4[%16, %c14_i32_69, %c0_i32_70] : memref<2x16x128xf32, #tpu.memory_space<vmem>> -> memref<1x1x128xf32, #tpu.memory_space<vmem>>
    %89 = tpu.memref_squeeze %88 : memref<1x1x128xf32, #tpu.memory_space<vmem>> -> memref<1x128xf32, #tpu.memory_space<vmem>>
    %90 = tpu.memref_slice %arg5[%16, %c14_i32] : memref<2x16x!tpu.dma_semaphore, #tpu.memory_space<semaphore_mem>> -> memref<1x1x!tpu.dma_semaphore, #tpu.memory_space<semaphore_mem>>
    %91 = tpu.memref_squeeze %90 : memref<1x1x!tpu.dma_semaphore, #tpu.memory_space<semaphore_mem>> -> memref<!tpu.dma_semaphore, #tpu.memory_space<semaphore_mem>>
    tpu.wait_dma2 semaphore(%91 : memref<!tpu.dma_semaphore, #tpu.memory_space<semaphore_mem>>) src(%87 : memref<1x128xf32, #tpu.memory_space<any>>) dst(%89 : memref<1x128xf32, #tpu.memory_space<vmem>>)
    %c15_i32 = arith.constant 15 : i32
    %c0_i32_71 = arith.constant 0 : i32
    %c0_i32_72 = arith.constant 0 : i32
    %92 = tpu.memref_slice %arg2[%c0_i32_71, %c0_i32_72] : memref<16x128xf32, #tpu.memory_space<any>> -> memref<1x128xf32, #tpu.memory_space<any>>
    %c15_i32_73 = arith.constant 15 : i32
    %c0_i32_74 = arith.constant 0 : i32
    %93 = tpu.memref_slice %arg4[%16, %c15_i32_73, %c0_i32_74] : memref<2x16x128xf32, #tpu.memory_space<vmem>> -> memref<1x1x128xf32, #tpu.memory_space<vmem>>
    %94 = tpu.memref_squeeze %93 : memref<1x1x128xf32, #tpu.memory_space<vmem>> -> memref<1x128xf32, #tpu.memory_space<vmem>>
    %95 = tpu.memref_slice %arg5[%16, %c15_i32] : memref<2x16x!tpu.dma_semaphore, #tpu.memory_space<semaphore_mem>> -> memref<1x1x!tpu.dma_semaphore, #tpu.memory_space<semaphore_mem>>
    %96 = tpu.memref_squeeze %95 : memref<1x1x!tpu.dma_semaphore, #tpu.memory_space<semaphore_mem>> -> memref<!tpu.dma_semaphore, #tpu.memory_space<semaphore_mem>>
    tpu.wait_dma2 semaphore(%96 : memref<!tpu.dma_semaphore, #tpu.memory_space<semaphore_mem>>) src(%92 : memref<1x128xf32, #tpu.memory_space<any>>) dst(%94 : memref<1x128xf32, #tpu.memory_space<vmem>>)
    %97 = arith.index_cast %16 : i32 to index
    %c0 = arith.constant 0 : index
    %c0_75 = arith.constant 0 : index
    %98 = vector.load %arg4[%97, %c0, %c0_75] : memref<2x16x128xf32, #tpu.memory_space<vmem>>, vector<1x16x128xf32>
    %99 = vector.shape_cast %98 : vector<1x16x128xf32> to vector<16x128xf32>
    %c0_76 = arith.constant 0 : index
    %c0_77 = arith.constant 0 : index
    %100 = vector.load %arg3[%c0_76, %c0_77] : memref<16x128xf32, #tpu.memory_space<vmem>>, vector<16x128xf32>
    tpu.vector_store %arg3[%c0_76, %c0_77], %99 {strides = array<i32>} : memref<16x128xf32, #tpu.memory_space<vmem>>, vector<16x128xf32>,
    return
  }
  func.func @transform_1(%arg0: i32, %arg1: memref<16xi32, #tpu.memory_space<smem>>) -> (i32, i32) {
    %c0_i32 = arith.constant 0 : i32
    %c0_i32_0 = arith.constant 0 : i32
    return %arg0, %c0_i32 : i32, i32
  }
}

</mosaic_0001>

<llo_original>
// kernel: tpu_custom_call.1
$region0: #{tpu_custom_call.1}
  #allocation0 [shape = 'u32[]', space=smem, size = 0x4, offset = 0x4, fixed_abs, tag = 'smem constant byte address 0x4 - core index']
  #allocation1 [shape = 'u32[144,128]{1,0:T(1,128)}', space=vmem, size = 0x12000, scoped, tag = 'internal scratch']
  %s0 = inlined_call_operand.vmem [shape: s32[16,1], index: 0, kind: input, shape index: {}]
  %s1 = inlined_call_operand.vmem [shape: f32[16,128], index: 1, kind: input, shape index: {}]
  %s2 = inlined_call_operand.hbm [shape: f32[16,128], index: 2, kind: output, shape index: {}]
  %s3 = sld [smem:[#allocation0]]
  $region18: #{tpu_custom_call.1} parent=0
    _
  %s5 = ssub.s32 1, %s3
  %s6 = scalar_select 0, %s5, %s3
  $region1: #{tpu_custom_call.1} parent=0
    #allocation2 [shape = 'u8[8192]{0}', space=vmem, size = 0x2000, scoped, tag = 'output window, operand 0, single buffered']
    #allocation3 [shape = 's32[1]{0}', space=sflag, size = 0x4, scoped, tag = 'scoped memory for tpu_custom_call.1']
    %7 = vsyncpa [#allocation3], 0
    // Predicated region
    $region2: #{tpu_custom_call.1} parent=1 // pred_check
      _
    $region3: #{tpu_custom_call.1} parent=1 // pred_check_branch
      %9 = sbr.rel (0) target = $region5
    $region4: #{tpu_custom_call.1} parent=1 // pred_region
      _
    $region5: #{tpu_custom_call.1} parent=1 // pred_fallthru
      _
    // Predicated region
    $region6: #{tpu_custom_call.1} parent=1 // pred_check
      _
    $region7: #{tpu_custom_call.1} parent=1 // pred_check_branch
      %11 = sbr.rel (0) target = $region9
    $region8: #{tpu_custom_call.1} parent=1 // pred_region
      _
    $region9: #{tpu_custom_call.1} parent=1 // pred_fallthru
      _
    %v12 = vld [vmem:[%s0] sm:$0xff]
    %v13 = vld [vmem:[%s0 + $0x8] sm:$0xff]
    %v14 = vlaneseq
    %v15 = vand.u32 %v14, 127
    %16 = vset.pattern.permute.xlu0 0
    %17 = vperm.xlu0 %16, %v12
    %v18 = vpop.permute.xlu0 %17
    %19 = vset.pattern.permute.xlu0 0
    %20 = vperm.xlu0 %19, %v13
    %v21 = vpop.permute.xlu0 %20
    %vm22 = vcmp.eq.s32.totalorder %v18, %v15
    %vm23 = vcmp.eq.s32.totalorder %v21, %v15
    %v24 = vsel %vm22, 1, 0
    %v25 = vsel %vm23, 1, 0
    %v26 = vcvt.s32.f32 %v24
    %v27 = vcvt.s32.f32 %v25
    %v28 = vld [vmem:[%s1] sm:$0xff]
    %v29 = vld [vmem:[%s1 + $0x8] sm:$0xff]
    %vm30 = vcmask 130048
    %v32 = vsel %vm30, %v26, 0
    %v35 = vsel %vm30, %v27, 0
    %37 = vmatprep.subr.mxu0 0.0
    %38 = vmatpush1.msra.mxu0 0.0
    %39 = vmatprep.subr.mxu0 0.0
    %40 = vmatpush1.msra.mxu0 0.0
    %41 = vmatprep.subr.mxu0 0.0
    %42 = vmatpush1.msra.mxu0 0.0
    %43 = vmatprep.subr.mxu0 0.0
    %44 = vmatpush1.msra.mxu0 0.0
    %45 = vmatprep.subr.mxu0 0.0
    %46 = vmatpush1.msra.mxu0 0.0
    %47 = vmatprep.subr.mxu0 0.0
    %48 = vmatpush1.msra.mxu0 0.0
    %49 = vmatprep.subr.mxu0 0.0
    %50 = vmatpush1.msra.mxu0 0.0
    %51 = vmatprep.subr.mxu0 0.0
    %52 = vmatpush1.msra.mxu0 0.0
    %53 = vmatprep.subr.mxu0 0.0
    %54 = vmatpush1.msra.mxu0 0.0
    %55 = vmatprep.subr.mxu0 0.0
    %56 = vmatpush1.msra.mxu0 0.0
    %57 = vmatprep.subr.mxu0 0.0
    %58 = vmatpush1.msra.mxu0 0.0
    %59 = vmatprep.subr.mxu0 0.0
    %60 = vmatpush1.msra.mxu0 0.0
    %61 = vmatprep.subr.mxu0 0.0
    %62 = vmatpush1.msra.mxu0 0.0
    %63 = vmatprep.subr.mxu0 0.0
    %64 = vmatpush1.msra.mxu0 0.0
    %65 = vmatprep.subr.mxu0 0.0
    %66 = vmatpush1.msra.mxu0 %v29
    %67 = vmatprep.subr.mxu0 0.0
    %68 = vmatpush1.msra.mxu0 %v28
    %69 = vmatprep.subr.mxu0 0.0
    %70 = vmatpush2.msra.mxu0 0.0
    %71 = vmatprep.subr.mxu0 0.0
    %72 = vmatpush2.msra.mxu0 0.0
    %73 = vmatprep.subr.mxu0 0.0
    %74 = vmatpush2.msra.mxu0 0.0
    %75 = vmatprep.subr.mxu0 0.0
    %76 = vmatpush2.msra.mxu0 0.0
    %77 = vmatprep.subr.mxu0 0.0
    %78 = vmatpush2.msra.mxu0 0.0
    %79 = vmatprep.subr.mxu0 0.0
    %80 = vmatpush2.msra.mxu0 0.0
    %81 = vmatprep.subr.mxu0 0.0
    %82 = vmatpush2.msra.mxu0 0.0
    %83 = vmatprep.subr.mxu0 0.0
    %84 = vmatpush2.msra.mxu0 0.0
    %85 = vmatprep.subr.mxu0 0.0
    %86 = vmatpush2.msra.mxu0 0.0
    %87 = vmatprep.subr.mxu0 0.0
    %88 = vmatpush2.msra.mxu0 0.0
    %89 = vmatprep.subr.mxu0 0.0
    %90 = vmatpush2.msra.mxu0 0.0
    %91 = vmatprep.subr.mxu0 0.0
    %92 = vmatpush2.msra.mxu0 0.0
    %93 = vmatprep.subr.mxu0 0.0
    %94 = vmatpush2.msra.mxu0 0.0
    %95 = vmatprep.subr.mxu0 0.0
    %96 = vmatpush2.msra.mxu0 0.0
    %97 = vmatprep.subr.mxu0 0.0
    %98 = vmatpush2.msra.mxu0 0.0
    %99 = vmatprep.subr.mxu0 0.0
    %100 = vmatpush2.msra.mxu0 0.0
    %101 = vmatprep.mubr.f32.mxu0 0.0
    %102 = vmatmul.mubr.f32.gmra.mxu0 %v32
    %v103 = vpop.f32.mrf.mxu0
    %v104 = vadd.f32 0.0, %v103
    %v105 = vpop.f32.mrf.mxu0
    %106 = vmatprep.mubr.f32.mxu0 0.0
    %107 = vmatmul.mubr.f32.gmra.mxu0 %v35
    %v108 = vpop.f32.mrf.mxu0
    %v109 = vadd.f32 0.0, %v108
    %v110 = vpop.f32.mrf.mxu0
    %111 = vdwg.mxu0
    %112 = vst [vmem:[#allocation2] sm:$0xff] %v104
    %113 = vst [vmem:[#allocation2 + $0x8] sm:$0xff] %v109
    // Predicated region
    $region10: #{tpu_custom_call.1} parent=1 // pred_check
      _
    $region11: #{tpu_custom_call.1} parent=1 // pred_check_branch
      %115 = sbr.rel (0) target = $region13
    $region12: #{tpu_custom_call.1} parent=1 // pred_region
      %s117 = ssub.s32 256, 256
      %118 = vsyncadd [#allocation3], %s117
      %s119 = sshll.u32 [#allocation2], 4
      %s120 = int_to_ptr.vmem [resolvable:$true] %s119
      %125 = dma.vmem_to_hbm [thread:$0]  %s120, 256, %s2, [#allocation3], 128, 128, 8
    $region13: #{tpu_custom_call.1} parent=1 // pred_fallthru
      _
    // Predicated region
    $region14: #{tpu_custom_call.1} parent=1 // pred_check
      _
    $region15: #{tpu_custom_call.1} parent=1 // pred_check_branch
      %127 = sbr.rel (0) target = $region17
    $region16: #{tpu_custom_call.1} parent=1 // pred_region
      %128 = dma.done [#allocation3], 256
    $region17: #{tpu_custom_call.1} parent=1 // pred_fallthru
      _
    %129 = vsyncpa [#allocation3], 1

// kernel: tpu_custom_call.1
$region0: #{tpu_custom_call.1}
  #allocation0 [shape = 'u32[]', space=smem, size = 0x4, offset = 0x4, fixed_abs, tag = 'smem constant byte address 0x4 - core index']
  #allocation1 [shape = 'u32[144,128]{1,0:T(1,128)}', space=vmem, size = 0x12000, scoped, tag = 'internal scratch']
  #allocation2 [shape = 'f32[2,16,128]{2,1,0:T(8,128)}', space=vmem, size = 0x4000, scoped, tag = 'scratch operand']
  #allocation3 [shape = 's32[32]{0}', space=sflag, size = 0x80, scoped, tag = 'scratch operand']
  #allocation4 [shape = 's32[1]{0}', space=sflag, size = 0x4, scoped, tag = 'scoped memory for tpu_custom_call.1']
  #allocation5 [shape = 'u8[512]{0}', space=smem, size = 0x200, scoped, tag = 'prefetched SMEM operand 0']
  #allocation8 [shape = 's32[]', space=sflag, size = 0x4, offset = 0, fixed_abs, tag = 'sflag constant byte address 0x0 - dummy sync flag']
  #allocation9 [shape = 's32[]', space=sflag, size = 0x4, offset = 0, fixed_abs, tag = 'sflag constant byte address 0x0 - dummy sync flag']
  #allocation10 [shape = 'u32[]', space=smem, size = 0x4, offset = 0x44, fixed_abs, tag = 'smem constant byte address 0x44 - assertion arg 0']
  #allocation11 [shape = 'u32[]', space=smem, size = 0x4, offset = 0x48, fixed_abs, tag = 'smem constant byte address 0x48 - assertion arg 1']
  #allocation12 [shape = 's32[]', space=sflag, size = 0x4, offset = 0, fixed_abs, tag = 'sflag constant byte address 0x0 - dummy sync flag']
  #allocation13 [shape = 's32[]', space=sflag, size = 0x4, offset = 0, fixed_abs, tag = 'sflag constant byte address 0x0 - dummy sync flag']
  #allocation14 [shape = 's32[]', space=sflag, size = 0x4, offset = 0, fixed_abs, tag = 'sflag constant byte address 0x0 - dummy sync flag']
  #allocation15 [shape = 's32[]', space=sflag, size = 0x4, offset = 0, fixed_abs, tag = 'sflag constant byte address 0x0 - dummy sync flag']
  #allocation16 [shape = 's32[]', space=sflag, size = 0x4, offset = 0, fixed_abs, tag = 'sflag constant byte address 0x0 - dummy sync flag']
  #allocation17 [shape = 's32[]', space=sflag, size = 0x4, offset = 0, fixed_abs, tag = 'sflag constant byte address 0x0 - dummy sync flag']
  #allocation18 [shape = 's32[]', space=sflag, size = 0x4, offset = 0, fixed_abs, tag = 'sflag constant byte address 0x0 - dummy sync flag']
  #allocation19 [shape = 's32[]', space=sflag, size = 0x4, offset = 0, fixed_abs, tag = 'sflag constant byte address 0x0 - dummy sync flag']
  #allocation20 [shape = 's32[]', space=sflag, size = 0x4, offset = 0, fixed_abs, tag = 'sflag constant byte address 0x0 - dummy sync flag']
  #allocation21 [shape = 's32[]', space=sflag, size = 0x4, offset = 0, fixed_abs, tag = 'sflag constant byte address 0x0 - dummy sync flag']
  #allocation22 [shape = 's32[]', space=sflag, size = 0x4, offset = 0, fixed_abs, tag = 'sflag constant byte address 0x0 - dummy sync flag']
  #allocation23 [shape = 's32[]', space=sflag, size = 0x4, offset = 0, fixed_abs, tag = 'sflag constant byte address 0x0 - dummy sync flag']
  #allocation24 [shape = 's32[]', space=sflag, size = 0x4, offset = 0, fixed_abs, tag = 'sflag constant byte address 0x0 - dummy sync flag']
  #allocation25 [shape = 's32[]', space=sflag, size = 0x4, offset = 0, fixed_abs, tag = 'sflag constant byte address 0x0 - dummy sync flag']
  #allocation26 [shape = 's32[]', space=sflag, size = 0x4, offset = 0, fixed_abs, tag = 'sflag constant byte address 0x0 - dummy sync flag']
  #allocation27 [shape = 's32[]', space=sflag, size = 0x4, offset = 0, fixed_abs, tag = 'sflag constant byte address 0x0 - dummy sync flag']
  #allocation28 [shape = 's32[]', space=sflag, size = 0x4, offset = 0, fixed_abs, tag = 'sflag constant byte address 0x0 - dummy sync flag']
  #allocation29 [shape = 's32[]', space=sflag, size = 0x4, offset = 0, fixed_abs, tag = 'sflag constant byte address 0x0 - dummy sync flag']
  #allocation30 [shape = 's32[]', space=sflag, size = 0x4, offset = 0, fixed_abs, tag = 'sflag constant byte address 0x0 - dummy sync flag']
  #allocation31 [shape = 's32[]', space=sflag, size = 0x4, offset = 0, fixed_abs, tag = 'sflag constant byte address 0x0 - dummy sync flag']
  #allocation32 [shape = 's32[]', space=sflag, size = 0x4, offset = 0, fixed_abs, tag = 'sflag constant byte address 0x0 - dummy sync flag']
  #allocation33 [shape = 's32[]', space=sflag, size = 0x4, offset = 0, fixed_abs, tag = 'sflag constant byte address 0x0 - dummy sync flag']
  #allocation34 [shape = 's32[]', space=sflag, size = 0x4, offset = 0, fixed_abs, tag = 'sflag constant byte address 0x0 - dummy sync flag']
  #allocation35 [shape = 's32[]', space=sflag, size = 0x4, offset = 0, fixed_abs, tag = 'sflag constant byte address 0x0 - dummy sync flag']
  #allocation36 [shape = 's32[]', space=sflag, size = 0x4, offset = 0, fixed_abs, tag = 'sflag constant byte address 0x0 - dummy sync flag']
  #allocation37 [shape = 's32[]', space=sflag, size = 0x4, offset = 0, fixed_abs, tag = 'sflag constant byte address 0x0 - dummy sync flag']
  #allocation38 [shape = 's32[]', space=sflag, size = 0x4, offset = 0, fixed_abs, tag = 'sflag constant byte address 0x0 - dummy sync flag']
  #allocation39 [shape = 's32[]', space=sflag, size = 0x4, offset = 0, fixed_abs, tag = 'sflag constant byte address 0x0 - dummy sync flag']
  #allocation40 [shape = 's32[]', space=sflag, size = 0x4, offset = 0, fixed_abs, tag = 'sflag constant byte address 0x0 - dummy sync flag']
  #allocation41 [shape = 's32[]', space=sflag, size = 0x4, offset = 0, fixed_abs, tag = 'sflag constant byte address 0x0 - dummy sync flag']
  #allocation42 [shape = 's32[]', space=sflag, size = 0x4, offset = 0, fixed_abs, tag = 'sflag constant byte address 0x0 - dummy sync flag']
  #allocation43 [shape = 's32[]', space=sflag, size = 0x4, offset = 0, fixed_abs, tag = 'sflag constant byte address 0x0 - dummy sync flag']
  #allocation44 [shape = 's32[]', space=sflag, size = 0x4, offset = 0, fixed_abs, tag = 'sflag constant byte address 0x0 - dummy sync flag']
  #allocation45 [shape = 's32[]', space=sflag, size = 0x4, offset = 0, fixed_abs, tag = 'sflag constant byte address 0x0 - dummy sync flag']
  #allocation46 [shape = 's32[]', space=sflag, size = 0x4, offset = 0, fixed_abs, tag = 'sflag constant byte address 0x0 - dummy sync flag']
  #allocation47 [shape = 's32[]', space=sflag, size = 0x4, offset = 0, fixed_abs, tag = 'sflag constant byte address 0x0 - dummy sync flag']
  #allocation48 [shape = 's32[]', space=sflag, size = 0x4, offset = 0, fixed_abs, tag = 'sflag constant byte address 0x0 - dummy sync flag']
  #allocation49 [shape = 's32[]', space=sflag, size = 0x4, offset = 0, fixed_abs, tag = 'sflag constant byte address 0x0 - dummy sync flag']
  #allocation50 [shape = 's32[]', space=sflag, size = 0x4, offset = 0, fixed_abs, tag = 'sflag constant byte address 0x0 - dummy sync flag']
  #allocation51 [shape = 's32[]', space=sflag, size = 0x4, offset = 0, fixed_abs, tag = 'sflag constant byte address 0x0 - dummy sync flag']
  #allocation52 [shape = 's32[]', space=sflag, size = 0x4, offset = 0, fixed_abs, tag = 'sflag constant byte address 0x0 - dummy sync flag']
  #allocation53 [shape = 's32[]', space=sflag, size = 0x4, offset = 0, fixed_abs, tag = 'sflag constant byte address 0x0 - dummy sync flag']
  #allocation54 [shape = 's32[]', space=sflag, size = 0x4, offset = 0, fixed_abs, tag = 'sflag constant byte address 0x0 - dummy sync flag']
  #allocation55 [shape = 's32[]', space=sflag, size = 0x4, offset = 0, fixed_abs, tag = 'sflag constant byte address 0x0 - dummy sync flag']
  #allocation56 [shape = 's32[]', space=sflag, size = 0x4, offset = 0, fixed_abs, tag = 'sflag constant byte address 0x0 - dummy sync flag']
  #allocation57 [shape = 's32[]', space=sflag, size = 0x4, offset = 0, fixed_abs, tag = 'sflag constant byte address 0x0 - dummy sync flag']
  #allocation58 [shape = 's32[]', space=sflag, size = 0x4, offset = 0, fixed_abs, tag = 'sflag constant byte address 0x0 - dummy sync flag']
  #allocation59 [shape = 's32[]', space=sflag, size = 0x4, offset = 0, fixed_abs, tag = 'sflag constant byte address 0x0 - dummy sync flag']
  #allocation60 [shape = 's32[]', space=sflag, size = 0x4, offset = 0, fixed_abs, tag = 'sflag constant byte address 0x0 - dummy sync flag']
  #allocation61 [shape = 's32[]', space=sflag, size = 0x4, offset = 0, fixed_abs, tag = 'sflag constant byte address 0x0 - dummy sync flag']
  #allocation62 [shape = 's32[]', space=sflag, size = 0x4, offset = 0, fixed_abs, tag = 'sflag constant byte address 0x0 - dummy sync flag']
  #allocation63 [shape = 's32[]', space=sflag, size = 0x4, offset = 0, fixed_abs, tag = 'sflag constant byte address 0x0 - dummy sync flag']
  #allocation64 [shape = 's32[]', space=sflag, size = 0x4, offset = 0, fixed_abs, tag = 'sflag constant byte address 0x0 - dummy sync flag']
  #allocation65 [shape = 's32[]', space=sflag, size = 0x4, offset = 0, fixed_abs, tag = 'sflag constant byte address 0x0 - dummy sync flag']
  #allocation66 [shape = 's32[]', space=sflag, size = 0x4, offset = 0, fixed_abs, tag = 'sflag constant byte address 0x0 - dummy sync flag']
  #allocation67 [shape = 's32[]', space=sflag, size = 0x4, offset = 0, fixed_abs, tag = 'sflag constant byte address 0x0 - dummy sync flag']
  #allocation68 [shape = 's32[]', space=sflag, size = 0x4, offset = 0, fixed_abs, tag = 'sflag constant byte address 0x0 - dummy sync flag']
  #allocation69 [shape = 's32[]', space=sflag, size = 0x4, offset = 0, fixed_abs, tag = 'sflag constant byte address 0x0 - dummy sync flag']
  #allocation70 [shape = 's32[]', space=sflag, size = 0x4, offset = 0, fixed_abs, tag = 'sflag constant byte address 0x0 - dummy sync flag']
  #allocation71 [shape = 's32[]', space=sflag, size = 0x4, offset = 0, fixed_abs, tag = 'sflag constant byte address 0x0 - dummy sync flag']
  #allocation72 [shape = 's32[]', space=sflag, size = 0x4, offset = 0, fixed_abs, tag = 'sflag constant byte address 0x0 - dummy sync flag']
  #allocation73 [shape = 's32[]', space=sflag, size = 0x4, offset = 0, fixed_abs, tag = 'sflag constant byte address 0x0 - dummy sync flag']
  %s0 = inlined_call_operand.hbm [shape: s32[16], index: 0, kind: input, shape index: {}]
  %s1 = inlined_call_operand.hbm [shape: f32[16,128], index: 1, kind: input, shape index: {}]
  %s2 = inlined_call_operand.hbm [shape: f32[16,128], index: 2, kind: output, shape index: {}]
  %s3 = sld [smem:[#allocation0]]
  $region146: #{tpu_custom_call.1} parent=0
    _
  %s5 = ssub.s32 1, %s3
  %s6 = scalar_select 0, %s5, %s3
  %8 = dma.hbm_to_smem %s0, 16, [#allocation5], [#allocation4]
  %9 = dma.done [#allocation4], 16
  %10 = sfence
  $region1: #{tpu_custom_call.1} parent=0
    #allocation6 [shape = 'u8[8192]{0}', space=vmem, size = 0x2000, scoped, tag = 'output window, operand 0, single buffered']
    #allocation7 [shape = 's32[1]{0}', space=sflag, size = 0x4, scoped, tag = 'scoped memory for tpu_custom_call.1']
    %11 = vsyncpa [#allocation7], 0
    %p12 = scmp.eq.s32.totalorder 0, 0
    // Predicated region
    $region2: #{tpu_custom_call.1} parent=1 // pred_check
      %p13 = pneg %p12
    $region3: #{tpu_custom_call.1} parent=1 // pred_check_branch
      %15 = sbr.rel (%p13) target = $region5
    $region4: #{tpu_custom_call.1} parent=1 // pred_region
      %s16 = sld [smem:[#allocation5]]
      %s17 = smul.addr %s16, 16
      %s18 = scalar_lea.hbm %s1, %s17
      // Predicated region
      $region6: #{tpu_custom_call.1} parent=4 // pred_check
        _
      $region7: #{tpu_custom_call.1} parent=4 // pred_check_branch
        %20 = sbr.rel target = $region9
      $region8: #{tpu_custom_call.1} parent=4 // pred_region
        %21 = sst [smem:[#allocation10]] [#allocation9]
        %22 = sst [smem:[#allocation11]] [#allocation8]
      $region9: #{tpu_custom_call.1} parent=4 // pred_fallthru
        _
      %24 = shalt.err (0)
      %s26 = sshll.u32 [#allocation2], 4
      %s27 = int_to_ptr.vmem [resolvable:$true] %s26
      %29 = dma.hbm_to_vmem [thread:$0]  %s18, 16, %s27, [#allocation3]
      %s30 = sld [smem:[#allocation5 + $0x1]]
      %s31 = smul.addr %s30, 16
      %s32 = scalar_lea.hbm %s1, %s31
      %s33 = scalar_lea.vmem [#allocation2], 1
      %s34 = scalar_lea.sflag [#allocation3], 1
      // Predicated region
      $region10: #{tpu_custom_call.1} parent=4 // pred_check
        _
      $region11: #{tpu_custom_call.1} parent=4 // pred_check_branch
        %36 = sbr.rel target = $region13
      $region12: #{tpu_custom_call.1} parent=4 // pred_region
        %37 = sst [smem:[#allocation10]] [#allocation13]
        %38 = sst [smem:[#allocation11]] [#allocation12]
      $region13: #{tpu_custom_call.1} parent=4 // pred_fallthru
        _
      %40 = shalt.err (0)
      %s42 = sshll.u32 %s33, 4
      %s43 = int_to_ptr.vmem [resolvable:$true] %s42
      %45 = dma.hbm_to_vmem [thread:$0]  %s32, 16, %s43, %s34
      %s46 = sld [smem:[#allocation5 + $0x2]]
      %s47 = smul.addr %s46, 16
      %s48 = scalar_lea.hbm %s1, %s47
      %s49 = scalar_lea.vmem [#allocation2], 2
      %s50 = scalar_lea.sflag [#allocation3], 2
      // Predicated region
      $region14: #{tpu_custom_call.1} parent=4 // pred_check
        _
      $region15: #{tpu_custom_call.1} parent=4 // pred_check_branch
        %52 = sbr.rel target = $region17
      $region16: #{tpu_custom_call.1} parent=4 // pred_region
        %53 = sst [smem:[#allocation10]] [#allocation15]
        %54 = sst [smem:[#allocation11]] [#allocation14]
      $region17: #{tpu_custom_call.1} parent=4 // pred_fallthru
        _
      %56 = shalt.err (0)
      %s58 = sshll.u32 %s49, 4
      %s59 = int_to_ptr.vmem [resolvable:$true] %s58
      %61 = dma.hbm_to_vmem [thread:$0]  %s48, 16, %s59, %s50
      %s62 = sld [smem:[#allocation5 + $0x3]]
      %s63 = smul.addr %s62, 16
      %s64 = scalar_lea.hbm %s1, %s63
      %s65 = scalar_lea.vmem [#allocation2], 3
      %s66 = scalar_lea.sflag [#allocation3], 3
      // Predicated region
      $region18: #{tpu_custom_call.1} parent=4 // pred_check
        _
      $region19: #{tpu_custom_call.1} parent=4 // pred_check_branch
        %68 = sbr.rel target = $region21
      $region20: #{tpu_custom_call.1} parent=4 // pred_region
        %69 = sst [smem:[#allocation10]] [#allocation17]
        %70 = sst [smem:[#allocation11]] [#allocation16]
      $region21: #{tpu_custom_call.1} parent=4 // pred_fallthru
        _
      %72 = shalt.err (0)
      %s74 = sshll.u32 %s65, 4
      %s75 = int_to_ptr.vmem [resolvable:$true] %s74
      %77 = dma.hbm_to_vmem [thread:$0]  %s64, 16, %s75, %s66
      %s78 = sld [smem:[#allocation5 + $0x4]]
      %s79 = smul.addr %s78, 16
      %s80 = scalar_lea.hbm %s1, %s79
      %s81 = scalar_lea.vmem [#allocation2], 4
      %s82 = scalar_lea.sflag [#allocation3], 4
      // Predicated region
      $region22: #{tpu_custom_call.1} parent=4 // pred_check
        _
      $region23: #{tpu_custom_call.1} parent=4 // pred_check_branch
        %84 = sbr.rel target = $region25
      $region24: #{tpu_custom_call.1} parent=4 // pred_region
        %85 = sst [smem:[#allocation10]] [#allocation19]
        %86 = sst [smem:[#allocation11]] [#allocation18]
      $region25: #{tpu_custom_call.1} parent=4 // pred_fallthru
        _
      %88 = shalt.err (0)
      %s90 = sshll.u32 %s81, 4
      %s91 = int_to_ptr.vmem [resolvable:$true] %s90
      %93 = dma.hbm_to_vmem [thread:$0]  %s80, 16, %s91, %s82
      %s94 = sld [smem:[#allocation5 + $0x5]]
      %s95 = smul.addr %s94, 16
      %s96 = scalar_lea.hbm %s1, %s95
      %s97 = scalar_lea.vmem [#allocation2], 5
      %s98 = scalar_lea.sflag [#allocation3], 5
      // Predicated region
      $region26: #{tpu_custom_call.1} parent=4 // pred_check
        _
      $region27: #{tpu_custom_call.1} parent=4 // pred_check_branch
        %100 = sbr.rel target = $region29
      $region28: #{tpu_custom_call.1} parent=4 // pred_region
        %101 = sst [smem:[#allocation10]] [#allocation21]
        %102 = sst [smem:[#allocation11]] [#allocation20]
      $region29: #{tpu_custom_call.1} parent=4 // pred_fallthru
        _
      %104 = shalt.err (0)
      %s106 = sshll.u32 %s97, 4
      %s107 = int_to_ptr.vmem [resolvable:$true] %s106
      %109 = dma.hbm_to_vmem [thread:$0]  %s96, 16, %s107, %s98
      %s110 = sld [smem:[#allocation5 + $0x6]]
      %s111 = smul.addr %s110, 16
      %s112 = scalar_lea.hbm %s1, %s111
      %s113 = scalar_lea.vmem [#allocation2], 6
      %s114 = scalar_lea.sflag [#allocation3], 6
      // Predicated region
      $region30: #{tpu_custom_call.1} parent=4 // pred_check
        _
      $region31: #{tpu_custom_call.1} parent=4 // pred_check_branch
        %116 = sbr.rel target = $region33
      $region32: #{tpu_custom_call.1} parent=4 // pred_region
        %117 = sst [smem:[#allocation10]] [#allocation23]
        %118 = sst [smem:[#allocation11]] [#allocation22]
      $region33: #{tpu_custom_call.1} parent=4 // pred_fallthru
        _
      %120 = shalt.err (0)
      %s122 = sshll.u32 %s113, 4
      %s123 = int_to_ptr.vmem [resolvable:$true] %s122
      %125 = dma.hbm_to_vmem [thread:$0]  %s112, 16, %s123, %s114
      %s126 = sld [smem:[#allocation5 + $0x7]]
      %s127 = smul.addr %s126, 16
      %s128 = scalar_lea.hbm %s1, %s127
      %s129 = scalar_lea.vmem [#allocation2], 7
      %s130 = scalar_lea.sflag [#allocation3], 7
      // Predicated region
      $region34: #{tpu_custom_call.1} parent=4 // pred_check
        _
      $region35: #{tpu_custom_call.1} parent=4 // pred_check_branch
        %132 = sbr.rel target = $region37
      $region36: #{tpu_custom_call.1} parent=4 // pred_region
        %133 = sst [smem:[#allocation10]] [#allocation25]
        %134 = sst [smem:[#allocation11]] [#allocation24]
      $region37: #{tpu_custom_call.1} parent=4 // pred_fallthru
        _
      %136 = shalt.err (0)
      %s138 = sshll.u32 %s129, 4
      %s139 = int_to_ptr.vmem [resolvable:$true] %s138
      %141 = dma.hbm_to_vmem [thread:$0]  %s128, 16, %s139, %s130
      %s142 = sld [smem:[#allocation5 + $0x8]]
      %s143 = smul.addr %s142, 16
      %s144 = scalar_lea.hbm %s1, %s143
      %s145 = scalar_lea.vmem [#allocation2], 8
      %s146 = scalar_lea.sflag [#allocation3], 8
      // Predicated region
      $region38: #{tpu_custom_call.1} parent=4 // pred_check
        _
      $region39: #{tpu_custom_call.1} parent=4 // pred_check_branch
        %148 = sbr.rel target = $region41
      $region40: #{tpu_custom_call.1} parent=4 // pred_region
        %149 = sst [smem:[#allocation10]] [#allocation27]
        %150 = sst [smem:[#allocation11]] [#allocation26]
      $region41: #{tpu_custom_call.1} parent=4 // pred_fallthru
        _
      %152 = shalt.err (0)
      %s154 = sshll.u32 %s145, 4
      %s155 = int_to_ptr.vmem [resolvable:$true] %s154
      %157 = dma.hbm_to_vmem [thread:$0]  %s144, 16, %s155, %s146
      %s158 = sld [smem:[#allocation5 + $0x9]]
      %s159 = smul.addr %s158, 16
      %s160 = scalar_lea.hbm %s1, %s159
      %s161 = scalar_lea.vmem [#allocation2], 9
      %s162 = scalar_lea.sflag [#allocation3], 9
      // Predicated region
      $region42: #{tpu_custom_call.1} parent=4 // pred_check
        _
      $region43: #{tpu_custom_call.1} parent=4 // pred_check_branch
        %164 = sbr.rel target = $region45
      $region44: #{tpu_custom_call.1} parent=4 // pred_region
        %165 = sst [smem:[#allocation10]] [#allocation29]
        %166 = sst [smem:[#allocation11]] [#allocation28]
      $region45: #{tpu_custom_call.1} parent=4 // pred_fallthru
        _
      %168 = shalt.err (0)
      %s170 = sshll.u32 %s161, 4
      %s171 = int_to_ptr.vmem [resolvable:$true] %s170
      %173 = dma.hbm_to_vmem [thread:$0]  %s160, 16, %s171, %s162
      %s174 = sld [smem:[#allocation5 + $0xa]]
      %s175 = smul.addr %s174, 16
      %s176 = scalar_lea.hbm %s1, %s175
      %s177 = scalar_lea.vmem [#allocation2], 10
      %s178 = scalar_lea.sflag [#allocation3], 10
      // Predicated region
      $region46: #{tpu_custom_call.1} parent=4 // pred_check
        _
      $region47: #{tpu_custom_call.1} parent=4 // pred_check_branch
        %180 = sbr.rel target = $region49
      $region48: #{tpu_custom_call.1} parent=4 // pred_region
        %181 = sst [smem:[#allocation10]] [#allocation31]
        %182 = sst [smem:[#allocation11]] [#allocation30]
      $region49: #{tpu_custom_call.1} parent=4 // pred_fallthru
        _
      %184 = shalt.err (0)
      %s186 = sshll.u32 %s177, 4
      %s187 = int_to_ptr.vmem [resolvable:$true] %s186
      %189 = dma.hbm_to_vmem [thread:$0]  %s176, 16, %s187, %s178
      %s190 = sld [smem:[#allocation5 + $0xb]]
      %s191 = smul.addr %s190, 16
      %s192 = scalar_lea.hbm %s1, %s191
      %s193 = scalar_lea.vmem [#allocation2], 11
      %s194 = scalar_lea.sflag [#allocation3], 11
      // Predicated region
      $region50: #{tpu_custom_call.1} parent=4 // pred_check
        _
      $region51: #{tpu_custom_call.1} parent=4 // pred_check_branch
        %196 = sbr.rel target = $region53
      $region52: #{tpu_custom_call.1} parent=4 // pred_region
        %197 = sst [smem:[#allocation10]] [#allocation33]
        %198 = sst [smem:[#allocation11]] [#allocation32]
      $region53: #{tpu_custom_call.1} parent=4 // pred_fallthru
        _
      %200 = shalt.err (0)
      %s202 = sshll.u32 %s193, 4
      %s203 = int_to_ptr.vmem [resolvable:$true] %s202
      %205 = dma.hbm_to_vmem [thread:$0]  %s192, 16, %s203, %s194
      %s206 = sld [smem:[#allocation5 + $0xc]]
      %s207 = smul.addr %s206, 16
      %s208 = scalar_lea.hbm %s1, %s207
      %s209 = scalar_lea.vmem [#allocation2], 12
      %s210 = scalar_lea.sflag [#allocation3], 12
      // Predicated region
      $region54: #{tpu_custom_call.1} parent=4 // pred_check
        _
      $region55: #{tpu_custom_call.1} parent=4 // pred_check_branch
        %212 = sbr.rel target = $region57
      $region56: #{tpu_custom_call.1} parent=4 // pred_region
        %213 = sst [smem:[#allocation10]] [#allocation35]
        %214 = sst [smem:[#allocation11]] [#allocation34]
      $region57: #{tpu_custom_call.1} parent=4 // pred_fallthru
        _
      %216 = shalt.err (0)
      %s218 = sshll.u32 %s209, 4
      %s219 = int_to_ptr.vmem [resolvable:$true] %s218
      %221 = dma.hbm_to_vmem [thread:$0]  %s208, 16, %s219, %s210
      %s222 = sld [smem:[#allocation5 + $0xd]]
      %s223 = smul.addr %s222, 16
      %s224 = scalar_lea.hbm %s1, %s223
      %s225 = scalar_lea.vmem [#allocation2], 13
      %s226 = scalar_lea.sflag [#allocation3], 13
      // Predicated region
      $region58: #{tpu_custom_call.1} parent=4 // pred_check
        _
      $region59: #{tpu_custom_call.1} parent=4 // pred_check_branch
        %228 = sbr.rel target = $region61
      $region60: #{tpu_custom_call.1} parent=4 // pred_region
        %229 = sst [smem:[#allocation10]] [#allocation37]
        %230 = sst [smem:[#allocation11]] [#allocation36]
      $region61: #{tpu_custom_call.1} parent=4 // pred_fallthru
        _
      %232 = shalt.err (0)
      %s234 = sshll.u32 %s225, 4
      %s235 = int_to_ptr.vmem [resolvable:$true] %s234
      %237 = dma.hbm_to_vmem [thread:$0]  %s224, 16, %s235, %s226
      %s238 = sld [smem:[#allocation5 + $0xe]]
      %s239 = smul.addr %s238, 16
      %s240 = scalar_lea.hbm %s1, %s239
      %s241 = scalar_lea.vmem [#allocation2], 14
      %s242 = scalar_lea.sflag [#allocation3], 14
      // Predicated region
      $region62: #{tpu_custom_call.1} parent=4 // pred_check
        _
      $region63: #{tpu_custom_call.1} parent=4 // pred_check_branch
        %244 = sbr.rel target = $region65
      $region64: #{tpu_custom_call.1} parent=4 // pred_region
        %245 = sst [smem:[#allocation10]] [#allocation39]
        %246 = sst [smem:[#allocation11]] [#allocation38]
      $region65: #{tpu_custom_call.1} parent=4 // pred_fallthru
        _
      %248 = shalt.err (0)
      %s250 = sshll.u32 %s241, 4
      %s251 = int_to_ptr.vmem [resolvable:$true] %s250
      %253 = dma.hbm_to_vmem [thread:$0]  %s240, 16, %s251, %s242
      %s254 = sld [smem:[#allocation5 + $0xf]]
      %s255 = smul.addr %s254, 16
      %s256 = scalar_lea.hbm %s1, %s255
      %s257 = scalar_lea.vmem [#allocation2], 15
      %s258 = scalar_lea.sflag [#allocation3], 15
      // Predicated region
      $region66: #{tpu_custom_call.1} parent=4 // pred_check
        _
      $region67: #{tpu_custom_call.1} parent=4 // pred_check_branch
        %260 = sbr.rel target = $region69
      $region68: #{tpu_custom_call.1} parent=4 // pred_region
        %261 = sst [smem:[#allocation10]] [#allocation41]
        %262 = sst [smem:[#allocation11]] [#allocation40]
      $region69: #{tpu_custom_call.1} parent=4 // pred_fallthru
        _
      %264 = shalt.err (0)
      %s266 = sshll.u32 %s257, 4
      %s267 = int_to_ptr.vmem [resolvable:$true] %s266
      %269 = dma.hbm_to_vmem [thread:$0]  %s256, 16, %s267, %s258
    $region5: #{tpu_custom_call.1} parent=1 // pred_fallthru
      _
    %s270 = sadd.s32 0, 1
    %p271 = scmp.lt.s32.totalorder %s270, 1
    // Predicated region
    $region70: #{tpu_custom_call.1} parent=1 // pred_check
      %p272 = pneg %p271
    $region71: #{tpu_custom_call.1} parent=1 // pred_check_branch
      %274 = sbr.rel (%p272) target = $region73
    $region72: #{tpu_custom_call.1} parent=1 // pred_region
      %p275 = scmp.lt.s32.totalorder %s270, 0
      %s276 = ssub.s32 0, %s270
      %s277 = scalar_select %p275, %s276, %s270
      %s278 = sand.u32 %s277, 1
      %s279 = ssub.s32 0, %s278
      %s280 = scalar_select %p275, %s279, %s278
      %p281 = scmp.ne.s32.totalorder %s280, 0
      %p282 = scmp.lt.s32.totalorder %s280, 0
      %p283 = pnand %p282, %p281
      %p284 = pneg %p283
      %s285 = sadd.s32 %s280, 2
      %s286 = scalar_select %p284, %s285, %s280
      %s287 = smul.u32 %s270, 16
      %s288 = sld [smem:[#allocation5 + %s287]]
      %s289 = smul.addr %s288, 16
      %s290 = scalar_lea.hbm %s1, %s289
      %s291 = smul.u32 %s286, 16
      %s292 = scalar_lea.vmem [#allocation2], %s291
      %s293 = scalar_lea.sflag [#allocation3], %s291
      // Predicated region
      $region74: #{tpu_custom_call.1} parent=72 // pred_check
        _
      $region75: #{tpu_custom_call.1} parent=72 // pred_check_branch
        %295 = sbr.rel target = $region77
      $region76: #{tpu_custom_call.1} parent=72 // pred_region
        %296 = sst [smem:[#allocation10]] [#allocation43]
        %297 = sst [smem:[#allocation11]] [#allocation42]
      $region77: #{tpu_custom_call.1} parent=72 // pred_fallthru
        _
      %299 = shalt.err (0)
      %s301 = sshll.u32 %s292, 4
      %s302 = int_to_ptr.vmem [resolvable:$true] %s301
      %304 = dma.hbm_to_vmem [thread:$0]  %s290, 16, %s302, %s293
      %s305 = sadd.s32 %s287, 1
      %s306 = sld [smem:[#allocation5 + %s305]]
      %s307 = smul.addr %s306, 16
      %s308 = scalar_lea.hbm %s1, %s307
      %s309 = sadd.s32 1, %s291
      %s310 = scalar_lea.vmem [#allocation2], %s309
      %s311 = scalar_lea.sflag [#allocation3], %s309
      // Predicated region
      $region78: #{tpu_custom_call.1} parent=72 // pred_check
        _
      $region79: #{tpu_custom_call.1} parent=72 // pred_check_branch
        %313 = sbr.rel target = $region81
      $region80: #{tpu_custom_call.1} parent=72 // pred_region
        %314 = sst [smem:[#allocation10]] [#allocation45]
        %315 = sst [smem:[#allocation11]] [#allocation44]
      $region81: #{tpu_custom_call.1} parent=72 // pred_fallthru
        _
      %317 = shalt.err (0)
      %s319 = sshll.u32 %s310, 4
      %s320 = int_to_ptr.vmem [resolvable:$true] %s319
      %322 = dma.hbm_to_vmem [thread:$0]  %s308, 16, %s320, %s311
      %s323 = sadd.s32 %s287, 2
      %s324 = sld [smem:[#allocation5 + %s323]]
      %s325 = smul.addr %s324, 16
      %s326 = scalar_lea.hbm %s1, %s325
      %s327 = sadd.s32 2, %s291
      %s328 = scalar_lea.vmem [#allocation2], %s327
      %s329 = scalar_lea.sflag [#allocation3], %s327
      // Predicated region
      $region82: #{tpu_custom_call.1} parent=72 // pred_check
        _
      $region83: #{tpu_custom_call.1} parent=72 // pred_check_branch
        %331 = sbr.rel target = $region85
      $region84: #{tpu_custom_call.1} parent=72 // pred_region
        %332 = sst [smem:[#allocation10]] [#allocation47]
        %333 = sst [smem:[#allocation11]] [#allocation46]
      $region85: #{tpu_custom_call.1} parent=72 // pred_fallthru
        _
      %335 = shalt.err (0)
      %s337 = sshll.u32 %s328, 4
      %s338 = int_to_ptr.vmem [resolvable:$true] %s337
      %340 = dma.hbm_to_vmem [thread:$0]  %s326, 16, %s338, %s329
      %s341 = sadd.s32 %s287, 3
      %s342 = sld [smem:[#allocation5 + %s341]]
      %s343 = smul.addr %s342, 16
      %s344 = scalar_lea.hbm %s1, %s343
      %s345 = sadd.s32 3, %s291
      %s346 = scalar_lea.vmem [#allocation2], %s345
      %s347 = scalar_lea.sflag [#allocation3], %s345
      // Predicated region
      $region86: #{tpu_custom_call.1} parent=72 // pred_check
        _
      $region87: #{tpu_custom_call.1} parent=72 // pred_check_branch
        %349 = sbr.rel target = $region89
      $region88: #{tpu_custom_call.1} parent=72 // pred_region
        %350 = sst [smem:[#allocation10]] [#allocation49]
        %351 = sst [smem:[#allocation11]] [#allocation48]
      $region89: #{tpu_custom_call.1} parent=72 // pred_fallthru
        _
      %353 = shalt.err (0)
      %s355 = sshll.u32 %s346, 4
      %s356 = int_to_ptr.vmem [resolvable:$true] %s355
      %358 = dma.hbm_to_vmem [thread:$0]  %s344, 16, %s356, %s347
      %s359 = sadd.s32 %s287, 4
      %s360 = sld [smem:[#allocation5 + %s359]]
      %s361 = smul.addr %s360, 16
      %s362 = scalar_lea.hbm %s1, %s361
      %s363 = sadd.s32 4, %s291
      %s364 = scalar_lea.vmem [#allocation2], %s363
      %s365 = scalar_lea.sflag [#allocation3], %s363
      // Predicated region
      $region90: #{tpu_custom_call.1} parent=72 // pred_check
        _
      $region91: #{tpu_custom_call.1} parent=72 // pred_check_branch
        %367 = sbr.rel target = $region93
      $region92: #{tpu_custom_call.1} parent=72 // pred_region
        %368 = sst [smem:[#allocation10]] [#allocation51]
        %369 = sst [smem:[#allocation11]] [#allocation50]
      $region93: #{tpu_custom_call.1} parent=72 // pred_fallthru
        _
      %371 = shalt.err (0)
      %s373 = sshll.u32 %s364, 4
      %s374 = int_to_ptr.vmem [resolvable:$true] %s373
      %376 = dma.hbm_to_vmem [thread:$0]  %s362, 16, %s374, %s365
      %s377 = sadd.s32 %s287, 5
      %s378 = sld [smem:[#allocation5 + %s377]]
      %s379 = smul.addr %s378, 16
      %s380 = scalar_lea.hbm %s1, %s379
      %s381 = sadd.s32 5, %s291
      %s382 = scalar_lea.vmem [#allocation2], %s381
      %s383 = scalar_lea.sflag [#allocation3], %s381
      // Predicated region
      $region94: #{tpu_custom_call.1} parent=72 // pred_check
        _
      $region95: #{tpu_custom_call.1} parent=72 // pred_check_branch
        %385 = sbr.rel target = $region97
      $region96: #{tpu_custom_call.1} parent=72 // pred_region
        %386 = sst [smem:[#allocation10]] [#allocation53]
        %387 = sst [smem:[#allocation11]] [#allocation52]
      $region97: #{tpu_custom_call.1} parent=72 // pred_fallthru
        _
      %389 = shalt.err (0)
      %s391 = sshll.u32 %s382, 4
      %s392 = int_to_ptr.vmem [resolvable:$true] %s391
      %394 = dma.hbm_to_vmem [thread:$0]  %s380, 16, %s392, %s383
      %s395 = sadd.s32 %s287, 6
      %s396 = sld [smem:[#allocation5 + %s395]]
      %s397 = smul.addr %s396, 16
      %s398 = scalar_lea.hbm %s1, %s397
      %s399 = sadd.s32 6, %s291
      %s400 = scalar_lea.vmem [#allocation2], %s399
      %s401 = scalar_lea.sflag [#allocation3], %s399
      // Predicated region
      $region98: #{tpu_custom_call.1} parent=72 // pred_check
        _
      $region99: #{tpu_custom_call.1} parent=72 // pred_check_branch
        %403 = sbr.rel target = $region101
      $region100: #{tpu_custom_call.1} parent=72 // pred_region
        %404 = sst [smem:[#allocation10]] [#allocation55]
        %405 = sst [smem:[#allocation11]] [#allocation54]
      $region101: #{tpu_custom_call.1} parent=72 // pred_fallthru
        _
      %407 = shalt.err (0)
      %s409 = sshll.u32 %s400, 4
      %s410 = int_to_ptr.vmem [resolvable:$true] %s409
      %412 = dma.hbm_to_vmem [thread:$0]  %s398, 16, %s410, %s401
      %s413 = sadd.s32 %s287, 7
      %s414 = sld [smem:[#allocation5 + %s413]]
      %s415 = smul.addr %s414, 16
      %s416 = scalar_lea.hbm %s1, %s415
      %s417 = sadd.s32 7, %s291
      %s418 = scalar_lea.vmem [#allocation2], %s417
      %s419 = scalar_lea.sflag [#allocation3], %s417
      // Predicated region
      $region102: #{tpu_custom_call.1} parent=72 // pred_check
        _
      $region103: #{tpu_custom_call.1} parent=72 // pred_check_branch
        %421 = sbr.rel target = $region105
      $region104: #{tpu_custom_call.1} parent=72 // pred_region
        %422 = sst [smem:[#allocation10]] [#allocation57]
        %423 = sst [smem:[#allocation11]] [#allocation56]
      $region105: #{tpu_custom_call.1} parent=72 // pred_fallthru
        _
      %425 = shalt.err (0)
      %s427 = sshll.u32 %s418, 4
      %s428 = int_to_ptr.vmem [resolvable:$true] %s427
      %430 = dma.hbm_to_vmem [thread:$0]  %s416, 16, %s428, %s419
      %s431 = sadd.s32 %s287, 8
      %s432 = sld [smem:[#allocation5 + %s431]]
      %s433 = smul.addr %s432, 16
      %s434 = scalar_lea.hbm %s1, %s433
      %s435 = sadd.s32 8, %s291
      %s436 = scalar_lea.vmem [#allocation2], %s435
      %s437 = scalar_lea.sflag [#allocation3], %s435
      // Predicated region
      $region106: #{tpu_custom_call.1} parent=72 // pred_check
        _
      $region107: #{tpu_custom_call.1} parent=72 // pred_check_branch
        %439 = sbr.rel target = $region109
      $region108: #{tpu_custom_call.1} parent=72 // pred_region
        %440 = sst [smem:[#allocation10]] [#allocation59]
        %441 = sst [smem:[#allocation11]] [#allocation58]
      $region109: #{tpu_custom_call.1} parent=72 // pred_fallthru
        _
      %443 = shalt.err (0)
      %s445 = sshll.u32 %s436, 4
      %s446 = int_to_ptr.vmem [resolvable:$true] %s445
      %448 = dma.hbm_to_vmem [thread:$0]  %s434, 16, %s446, %s437
      %s449 = sadd.s32 %s287, 9
      %s450 = sld [smem:[#allocation5 + %s449]]
      %s451 = smul.addr %s450, 16
      %s452 = scalar_lea.hbm %s1, %s451
      %s453 = sadd.s32 9, %s291
      %s454 = scalar_lea.vmem [#allocation2], %s453
      %s455 = scalar_lea.sflag [#allocation3], %s453
      // Predicated region
      $region110: #{tpu_custom_call.1} parent=72 // pred_check
        _
      $region111: #{tpu_custom_call.1} parent=72 // pred_check_branch
        %457 = sbr.rel target = $region113
      $region112: #{tpu_custom_call.1} parent=72 // pred_region
        %458 = sst [smem:[#allocation10]] [#allocation61]
        %459 = sst [smem:[#allocation11]] [#allocation60]
      $region113: #{tpu_custom_call.1} parent=72 // pred_fallthru
        _
      %461 = shalt.err (0)
      %s463 = sshll.u32 %s454, 4
      %s464 = int_to_ptr.vmem [resolvable:$true] %s463
      %466 = dma.hbm_to_vmem [thread:$0]  %s452, 16, %s464, %s455
      %s467 = sadd.s32 %s287, 10
      %s468 = sld [smem:[#allocation5 + %s467]]
      %s469 = smul.addr %s468, 16
      %s470 = scalar_lea.hbm %s1, %s469
      %s471 = sadd.s32 10, %s291
      %s472 = scalar_lea.vmem [#allocation2], %s471
      %s473 = scalar_lea.sflag [#allocation3], %s471
      // Predicated region
      $region114: #{tpu_custom_call.1} parent=72 // pred_check
        _
      $region115: #{tpu_custom_call.1} parent=72 // pred_check_branch
        %475 = sbr.rel target = $region117
      $region116: #{tpu_custom_call.1} parent=72 // pred_region
        %476 = sst [smem:[#allocation10]] [#allocation63]
        %477 = sst [smem:[#allocation11]] [#allocation62]
      $region117: #{tpu_custom_call.1} parent=72 // pred_fallthru
        _
      %479 = shalt.err (0)
      %s481 = sshll.u32 %s472, 4
      %s482 = int_to_ptr.vmem [resolvable:$true] %s481
      %484 = dma.hbm_to_vmem [thread:$0]  %s470, 16, %s482, %s473
      %s485 = sadd.s32 %s287, 11
      %s486 = sld [smem:[#allocation5 + %s485]]
      %s487 = smul.addr %s486, 16
      %s488 = scalar_lea.hbm %s1, %s487
      %s489 = sadd.s32 11, %s291
      %s490 = scalar_lea.vmem [#allocation2], %s489
      %s491 = scalar_lea.sflag [#allocation3], %s489
      // Predicated region
      $region118: #{tpu_custom_call.1} parent=72 // pred_check
        _
      $region119: #{tpu_custom_call.1} parent=72 // pred_check_branch
        %493 = sbr.rel target = $region121
      $region120: #{tpu_custom_call.1} parent=72 // pred_region
        %494 = sst [smem:[#allocation10]] [#allocation65]
        %495 = sst [smem:[#allocation11]] [#allocation64]
      $region121: #{tpu_custom_call.1} parent=72 // pred_fallthru
        _
      %497 = shalt.err (0)
      %s499 = sshll.u32 %s490, 4
      %s500 = int_to_ptr.vmem [resolvable:$true] %s499
      %502 = dma.hbm_to_vmem [thread:$0]  %s488, 16, %s500, %s491
      %s503 = sadd.s32 %s287, 12
      %s504 = sld [smem:[#allocation5 + %s503]]
      %s505 = smul.addr %s504, 16
      %s506 = scalar_lea.hbm %s1, %s505
      %s507 = sadd.s32 12, %s291
      %s508 = scalar_lea.vmem [#allocation2], %s507
      %s509 = scalar_lea.sflag [#allocation3], %s507
      // Predicated region
      $region122: #{tpu_custom_call.1} parent=72 // pred_check
        _
      $region123: #{tpu_custom_call.1} parent=72 // pred_check_branch
        %511 = sbr.rel target = $region125
      $region124: #{tpu_custom_call.1} parent=72 // pred_region
        %512 = sst [smem:[#allocation10]] [#allocation67]
        %513 = sst [smem:[#allocation11]] [#allocation66]
      $region125: #{tpu_custom_call.1} parent=72 // pred_fallthru
        _
      %515 = shalt.err (0)
      %s517 = sshll.u32 %s508, 4
      %s518 = int_to_ptr.vmem [resolvable:$true] %s517
      %520 = dma.hbm_to_vmem [thread:$0]  %s506, 16, %s518, %s509
      %s521 = sadd.s32 %s287, 13
      %s522 = sld [smem:[#allocation5 + %s521]]
      %s523 = smul.addr %s522, 16
      %s524 = scalar_lea.hbm %s1, %s523
      %s525 = sadd.s32 13, %s291
      %s526 = scalar_lea.vmem [#allocation2], %s525
      %s527 = scalar_lea.sflag [#allocation3], %s525
      // Predicated region
      $region126: #{tpu_custom_call.1} parent=72 // pred_check
        _
      $region127: #{tpu_custom_call.1} parent=72 // pred_check_branch
        %529 = sbr.rel target = $region129
      $region128: #{tpu_custom_call.1} parent=72 // pred_region
        %530 = sst [smem:[#allocation10]] [#allocation69]
        %531 = sst [smem:[#allocation11]] [#allocation68]
      $region129: #{tpu_custom_call.1} parent=72 // pred_fallthru
        _
      %533 = shalt.err (0)
      %s535 = sshll.u32 %s526, 4
      %s536 = int_to_ptr.vmem [resolvable:$true] %s535
      %538 = dma.hbm_to_vmem [thread:$0]  %s524, 16, %s536, %s527
      %s539 = sadd.s32 %s287, 14
      %s540 = sld [smem:[#allocation5 + %s539]]
      %s541 = smul.addr %s540, 16
      %s542 = scalar_lea.hbm %s1, %s541
      %s543 = sadd.s32 14, %s291
      %s544 = scalar_lea.vmem [#allocation2], %s543
      %s545 = scalar_lea.sflag [#allocation3], %s543
      // Predicated region
      $region130: #{tpu_custom_call.1} parent=72 // pred_check
        _
      $region131: #{tpu_custom_call.1} parent=72 // pred_check_branch
        %547 = sbr.rel target = $region133
      $region132: #{tpu_custom_call.1} parent=72 // pred_region
        %548 = sst [smem:[#allocation10]] [#allocation71]
        %549 = sst [smem:[#allocation11]] [#allocation70]
      $region133: #{tpu_custom_call.1} parent=72 // pred_fallthru
        _
      %551 = shalt.err (0)
      %s553 = sshll.u32 %s544, 4
      %s554 = int_to_ptr.vmem [resolvable:$true] %s553
      %556 = dma.hbm_to_vmem [thread:$0]  %s542, 16, %s554, %s545
      %s557 = sadd.s32 %s287, 15
      %s558 = sld [smem:[#allocation5 + %s557]]
      %s559 = smul.addr %s558, 16
      %s560 = scalar_lea.hbm %s1, %s559
      %s561 = sadd.s32 15, %s291
      %s562 = scalar_lea.vmem [#allocation2], %s561
      %s563 = scalar_lea.sflag [#allocation3], %s561
      // Predicated region
      $region134: #{tpu_custom_call.1} parent=72 // pred_check
        _
      $region135: #{tpu_custom_call.1} parent=72 // pred_check_branch
        %565 = sbr.rel target = $region137
      $region136: #{tpu_custom_call.1} parent=72 // pred_region
        %566 = sst [smem:[#allocation10]] [#allocation73]
        %567 = sst [smem:[#allocation11]] [#allocation72]
      $region137: #{tpu_custom_call.1} parent=72 // pred_fallthru
        _
      %569 = shalt.err (0)
      %s571 = sshll.u32 %s562, 4
      %s572 = int_to_ptr.vmem [resolvable:$true] %s571
      %574 = dma.hbm_to_vmem [thread:$0]  %s560, 16, %s572, %s563
    $region73: #{tpu_custom_call.1} parent=1 // pred_fallthru
      _
    %s575 = ssub.s32 0, 0
    %s576 = ssub.s32 0, 0
    %p577 = scmp.ne.s32.totalorder 0, 0
    %p578 = scmp.lt.s32.totalorder 0, 0
    %p579 = pnand %p578, %p577
    %p580 = pneg %p579
    %s581 = sadd.s32 0, 2
    %s582 = scalar_select %p580, %s581, 0
    %s583 = smul.u32 %s582, 16
    %s584 = scalar_lea.sflag [#allocation3], %s583
    %s585 = smul.u32 1, 1
    %s586 = sshll.u32 %s585, 4
    %587 = dma.done %s584, %s586
    %s588 = sadd.s32 1, %s583
    %s589 = scalar_lea.sflag [#allocation3], %s588
    %s590 = sshll.u32 %s585, 4
    %591 = dma.done %s589, %s590
    %s592 = sadd.s32 2, %s583
    %s593 = scalar_lea.sflag [#allocation3], %s592
    %s594 = sshll.u32 %s585, 4
    %595 = dma.done %s593, %s594
    %s596 = sadd.s32 3, %s583
    %s597 = scalar_lea.sflag [#allocation3], %s596
    %s598 = sshll.u32 %s585, 4
    %599 = dma.done %s597, %s598
    %s600 = sadd.s32 4, %s583
    %s601 = scalar_lea.sflag [#allocation3], %s600
    %s602 = sshll.u32 %s585, 4
    %603 = dma.done %s601, %s602
    %s604 = sadd.s32 5, %s583
    %s605 = scalar_lea.sflag [#allocation3], %s604
    %s606 = sshll.u32 %s585, 4
    %607 = dma.done %s605, %s606
    %s608 = sadd.s32 6, %s583
    %s609 = scalar_lea.sflag [#allocation3], %s608
    %s610 = sshll.u32 %s585, 4
    %611 = dma.done %s609, %s610
    %s612 = sadd.s32 7, %s583
    %s613 = scalar_lea.sflag [#allocation3], %s612
    %s614 = sshll.u32 %s585, 4
    %615 = dma.done %s613, %s614
    %s616 = sadd.s32 8, %s583
    %s617 = scalar_lea.sflag [#allocation3], %s616
    %s618 = sshll.u32 %s585, 4
    %619 = dma.done %s617, %s618
    %s620 = sadd.s32 9, %s583
    %s621 = scalar_lea.sflag [#allocation3], %s620
    %s622 = sshll.u32 %s585, 4
    %623 = dma.done %s621, %s622
    %s624 = sadd.s32 10, %s583
    %s625 = scalar_lea.sflag [#allocation3], %s624
    %s626 = sshll.u32 %s585, 4
    %627 = dma.done %s625, %s626
    %s628 = sadd.s32 11, %s583
    %s629 = scalar_lea.sflag [#allocation3], %s628
    %s630 = sshll.u32 %s585, 4
    %631 = dma.done %s629, %s630
    %s632 = sadd.s32 12, %s583
    %s633 = scalar_lea.sflag [#allocation3], %s632
    %s634 = sshll.u32 %s585, 4
    %635 = dma.done %s633, %s634
    %s636 = sadd.s32 13, %s583
    %s637 = scalar_lea.sflag [#allocation3], %s636
    %s638 = sshll.u32 %s585, 4
    %639 = dma.done %s637, %s638
    %s640 = sadd.s32 14, %s583
    %s641 = scalar_lea.sflag [#allocation3], %s640
    %s642 = sshll.u32 %s585, 4
    %643 = dma.done %s641, %s642
    %s644 = sadd.s32 15, %s583
    %s645 = scalar_lea.sflag [#allocation3], %s644
    %s646 = sshll.u32 %s585, 4
    %647 = dma.done %s645, %s646
    %s648 = scalar_lea.vmem [#allocation2], %s583
    %v649 = vld [vmem:[%s648] sm:$0xff]
    %v650 = vld [vmem:[%s648 + $0x8] sm:$0xff]
    %651 = vst [vmem:[#allocation6] sm:$0xff] %v649
    %652 = vst [vmem:[#allocation6 + $0x8] sm:$0xff] %v650
    // Predicated region
    $region138: #{tpu_custom_call.1} parent=1 // pred_check
      _
    $region139: #{tpu_custom_call.1} parent=1 // pred_check_branch
      %654 = sbr.rel (0) target = $region141
    $region140: #{tpu_custom_call.1} parent=1 // pred_region
      %s656 = ssub.s32 256, 256
      %657 = vsyncadd [#allocation7], %s656
      %s658 = sshll.u32 [#allocation6], 4
      %s659 = int_to_ptr.vmem [resolvable:$true] %s658
      %664 = dma.vmem_to_hbm [thread:$0]  %s659, 256, %s2, [#allocation7], 128, 128, 8
    $region141: #{tpu_custom_call.1} parent=1 // pred_fallthru
      _
    // Predicated region
    $region142: #{tpu_custom_call.1} parent=1 // pred_check
      _
    $region143: #{tpu_custom_call.1} parent=1 // pred_check_branch
      %666 = sbr.rel (0) target = $region145
    $region144: #{tpu_custom_call.1} parent=1 // pred_region
      %667 = dma.done [#allocation7], 256
    $region145: #{tpu_custom_call.1} parent=1 // pred_fallthru
      _
    %668 = vsyncpa [#allocation7], 1
  %669 = vsyncmov [#allocation3]
  %s670 = vpop.sfrf %669
  %p671 = scmp.eq.s32.totalorder %s670, 0
  %p672 = pneg %p671
  %674 = shalt.err (%p672)
  %s675 = scalar_lea.sflag [#allocation3], 1
  %676 = vsyncmov %s675
  %s677 = vpop.sfrf %676
  %p678 = scmp.eq.s32.totalorder %s677, 0
  %p679 = pneg %p678
  %681 = shalt.err (%p679)
  %s682 = scalar_lea.sflag [#allocation3], 2
  %683 = vsyncmov %s682
  %s684 = vpop.sfrf %683
  %p685 = scmp.eq.s32.totalorder %s684, 0
  %p686 = pneg %p685
  %688 = shalt.err (%p686)
  %s689 = scalar_lea.sflag [#allocation3], 3
  %690 = vsyncmov %s689
  %s691 = vpop.sfrf %690
  %p692 = scmp.eq.s32.totalorder %s691, 0
  %p693 = pneg %p692
  %695 = shalt.err (%p693)
  %s696 = scalar_lea.sflag [#allocation3], 4
  %697 = vsyncmov %s696
  %s698 = vpop.sfrf %697
  %p699 = scmp.eq.s32.totalorder %s698, 0
  %p700 = pneg %p699
  %702 = shalt.err (%p700)
  %s703 = scalar_lea.sflag [#allocation3], 5
  %704 = vsyncmov %s703
  %s705 = vpop.sfrf %704
  %p706 = scmp.eq.s32.totalorder %s705, 0
  %p707 = pneg %p706
  %709 = shalt.err (%p707)
  %s710 = scalar_lea.sflag [#allocation3], 6
  %711 = vsyncmov %s710
  %s712 = vpop.sfrf %711
  %p713 = scmp.eq.s32.totalorder %s712, 0
  %p714 = pneg %p713
  %716 = shalt.err (%p714)
  %s717 = scalar_lea.sflag [#allocation3], 7
  %718 = vsyncmov %s717
  %s719 = vpop.sfrf %718
  %p720 = scmp.eq.s32.totalorder %s719, 0
  %p721 = pneg %p720
  %723 = shalt.err (%p721)
  %s724 = scalar_lea.sflag [#allocation3], 8
  %725 = vsyncmov %s724
  %s726 = vpop.sfrf %725
  %p727 = scmp.eq.s32.totalorder %s726, 0
  %p728 = pneg %p727
  %730 = shalt.err (%p728)
  %s731 = scalar_lea.sflag [#allocation3], 9
  %732 = vsyncmov %s731
  %s733 = vpop.sfrf %732
  %p734 = scmp.eq.s32.totalorder %s733, 0
  %p735 = pneg %p734
  %737 = shalt.err (%p735)
  %s738 = scalar_lea.sflag [#allocation3], 10
  %739 = vsyncmov %s738
  %s740 = vpop.sfrf %739
  %p741 = scmp.eq.s32.totalorder %s740, 0
  %p742 = pneg %p741
  %744 = shalt.err (%p742)
  %s745 = scalar_lea.sflag [#allocation3], 11
  %746 = vsyncmov %s745
  %s747 = vpop.sfrf %746
  %p748 = scmp.eq.s32.totalorder %s747, 0
  %p749 = pneg %p748
  %751 = shalt.err (%p749)
  %s752 = scalar_lea.sflag [#allocation3], 12
  %753 = vsyncmov %s752
  %s754 = vpop.sfrf %753
  %p755 = scmp.eq.s32.totalorder %s754, 0
  %p756 = pneg %p755
  %758 = shalt.err (%p756)
  %s759 = scalar_lea.sflag [#allocation3], 13
  %760 = vsyncmov %s759
  %s761 = vpop.sfrf %760
  %p762 = scmp.eq.s32.totalorder %s761, 0
  %p763 = pneg %p762
  %765 = shalt.err (%p763)
  %s766 = scalar_lea.sflag [#allocation3], 14
  %767 = vsyncmov %s766
  %s768 = vpop.sfrf %767
  %p769 = scmp.eq.s32.totalorder %s768, 0
  %p770 = pneg %p769
  %772 = shalt.err (%p770)
  %s773 = scalar_lea.sflag [#allocation3], 15
  %774 = vsyncmov %s773
  %s775 = vpop.sfrf %774
  %p776 = scmp.eq.s32.totalorder %s775, 0
  %p777 = pneg %p776
  %779 = shalt.err (%p777)
  %s780 = scalar_lea.sflag [#allocation3], 16
  %781 = vsyncmov %s780
  %s782 = vpop.sfrf %781
  %p783 = scmp.eq.s32.totalorder %s782, 0
  %p784 = pneg %p783
  %786 = shalt.err (%p784)
  %s787 = scalar_lea.sflag [#allocation3], 17
  %788 = vsyncmov %s787
  %s789 = vpop.sfrf %788
  %p790 = scmp.eq.s32.totalorder %s789, 0
  %p791 = pneg %p790
  %793 = shalt.err (%p791)
  %s794 = scalar_lea.sflag [#allocation3], 18
  %795 = vsyncmov %s794
  %s796 = vpop.sfrf %795
  %p797 = scmp.eq.s32.totalorder %s796, 0
  %p798 = pneg %p797
  %800 = shalt.err (%p798)
  %s801 = scalar_lea.sflag [#allocation3], 19
  %802 = vsyncmov %s801
  %s803 = vpop.sfrf %802
  %p804 = scmp.eq.s32.totalorder %s803, 0
  %p805 = pneg %p804
  %807 = shalt.err (%p805)
  %s808 = scalar_lea.sflag [#allocation3], 20
  %809 = vsyncmov %s808
  %s810 = vpop.sfrf %809
  %p811 = scmp.eq.s32.totalorder %s810, 0
  %p812 = pneg %p811
  %814 = shalt.err (%p812)
  %s815 = scalar_lea.sflag [#allocation3], 21
  %816 = vsyncmov %s815
  %s817 = vpop.sfrf %816
  %p818 = scmp.eq.s32.totalorder %s817, 0
  %p819 = pneg %p818
  %821 = shalt.err (%p819)
  %s822 = scalar_lea.sflag [#allocation3], 22
  %823 = vsyncmov %s822
  %s824 = vpop.sfrf %823
  %p825 = scmp.eq.s32.totalorder %s824, 0
  %p826 = pneg %p825
  %828 = shalt.err (%p826)
  %s829 = scalar_lea.sflag [#allocation3], 23
  %830 = vsyncmov %s829
  %s831 = vpop.sfrf %830
  %p832 = scmp.eq.s32.totalorder %s831, 0
  %p833 = pneg %p832
  %835 = shalt.err (%p833)
  %s836 = scalar_lea.sflag [#allocation3], 24
  %837 = vsyncmov %s836
  %s838 = vpop.sfrf %837
  %p839 = scmp.eq.s32.totalorder %s838, 0
  %p840 = pneg %p839
  %842 = shalt.err (%p840)
  %s843 = scalar_lea.sflag [#allocation3], 25
  %844 = vsyncmov %s843
  %s845 = vpop.sfrf %844
  %p846 = scmp.eq.s32.totalorder %s845, 0
  %p847 = pneg %p846
  %849 = shalt.err (%p847)
  %s850 = scalar_lea.sflag [#allocation3], 26
  %851 = vsyncmov %s850
  %s852 = vpop.sfrf %851
  %p853 = scmp.eq.s32.totalorder %s852, 0
  %p854 = pneg %p853
  %856 = shalt.err (%p854)
  %s857 = scalar_lea.sflag [#allocation3], 27
  %858 = vsyncmov %s857
  %s859 = vpop.sfrf %858
  %p860 = scmp.eq.s32.totalorder %s859, 0
  %p861 = pneg %p860
  %863 = shalt.err (%p861)
  %s864 = scalar_lea.sflag [#allocation3], 28
  %865 = vsyncmov %s864
  %s866 = vpop.sfrf %865
  %p867 = scmp.eq.s32.totalorder %s866, 0
  %p868 = pneg %p867
  %870 = shalt.err (%p868)
  %s871 = scalar_lea.sflag [#allocation3], 29
  %872 = vsyncmov %s871
  %s873 = vpop.sfrf %872
  %p874 = scmp.eq.s32.totalorder %s873, 0
  %p875 = pneg %p874
  %877 = shalt.err (%p875)
  %s878 = scalar_lea.sflag [#allocation3], 30
  %879 = vsyncmov %s878
  %s880 = vpop.sfrf %879
  %p881 = scmp.eq.s32.totalorder %s880, 0
  %p882 = pneg %p881
  %884 = shalt.err (%p882)
  %s885 = scalar_lea.sflag [#allocation3], 31
  %886 = vsyncmov %s885
  %s887 = vpop.sfrf %886
  %p888 = scmp.eq.s32.totalorder %s887, 0
  %p889 = pneg %p888
  %891 = shalt.err (%p889)

</llo_original>
